<compile_context>
chip_gen: v7x
topology: tpu7x:2x2x1
jax: 0.10.0
libtpu: 0.0.40
codegen_flags: <defaults>
</compile_context>

<pallas_src>
import math

import jax
import jax.numpy as jnp
from jax.experimental import pallas as pl
from jax.experimental.pallas import tpu as pltpu

# ----------------------------- configuration -------------------------------
BATCH = 2
SEQ = 8
D_MODEL = 32
NUM_HEADS = 4
D_KV = 8
INNER = NUM_HEADS * D_KV            # 32
NUM_BUCKETS = 32                    # rel_att_nai_bas
MAX_DISTANCE = 128
LN_EPS = 1e-6
IS_DECODER = False                  # dec_or_not -> bidirectional buckets


# ------------------------------ Pallas kernel -------------------------------
def t5_self_attn_kernel(x_ref, w_ref, bias_ref, out_ref):
    # x_ref: (B*S, D) rows (batch folded); w_ref: (D, 3*INNER + D) packed slab;
    # bias_ref: (H, S, S) relative-position bias.
    xf = x_ref[...]                                        # (B*S, D) fp32

    # --- T5 LayerNorm: RMS over last dim, no mean subtraction, fp32.
    # The learned gain is folded into the QKV weight columns host-side.
    var = jnp.mean(xf * xf, axis=-1, keepdims=True)
    hn = xf * jax.lax.rsqrt(var + LN_EPS)                  # (B*S, D)

    w_all = w_ref[...]                                     # (D, 128)
    w_qkv = w_all[:, :3 * INNER]                           # (D, 3*INNER)
    wo_t = w_all[:, 3 * INNER:3 * INNER + D_MODEL]         # (INNER, D), INNER==D

    # One fused Q/K/V projection for all heads (single MXU pass, no bias,
    # no 1/sqrt(d) scaling in T5).
    qkv = jnp.dot(hn, w_qkv, preferred_element_type=jnp.float32)   # (B*S, 96)

    head_ctx = []
    for hh in range(NUM_HEADS):            # static unroll over heads
        # Static lane slices at multiples of D_KV inside one (8,128) tile.
        q_h = qkv[:, hh * D_KV:(hh + 1) * D_KV]                      # (B*S, 8)
        k_h = qkv[:, INNER + hh * D_KV:INNER + (hh + 1) * D_KV]
        v_h = qkv[:, 2 * INNER + hh * D_KV:2 * INNER + (hh + 1) * D_KV]
        bias_h = bias_ref[hh]                                        # (S, S)

        parts = []
        for b in range(BATCH):             # static unroll; sublane-aligned rows
            rows = slice(b * SEQ, (b + 1) * SEQ)
            qb, kb, vb = q_h[rows], k_h[rows], v_h[rows]

            # scores + relative-position bias, numerically-stable softmax
            s = jnp.dot(qb, kb.T, preferred_element_type=jnp.float32) + bias_h
            m = jnp.max(s, axis=-1, keepdims=True)
            e = jnp.exp(s - m)
            den = jnp.sum(e, axis=-1, keepdims=True)

            # Deferred normalization: normalize after the PV matmul.
            pv = jnp.dot(e, vb, preferred_element_type=jnp.float32)  # (S, D_KV)
            r = pl.reciprocal(den, approx=True)    # EUP slot (free-ish)
            r = r * (2.0 - den * r)                # one Newton step -> fp32 acc.
            parts.append(pv * r)
        head_ctx.append(jnp.concatenate(parts, axis=0))              # (B*S, D_KV)

    # Lane-concatenate per-head contexts, ONE fused output projection.
    ctx = jnp.concatenate(head_ctx, axis=1)                          # (B*S, INNER)
    attn_out = jnp.dot(ctx, wo_t, preferred_element_type=jnp.float32)  # (B*S, D)

    # Residual add + single full-block store (dropout = identity in eval mode).
    out_ref[...] = (xf + attn_out).astype(out_ref.dtype)


def t5_layer_self_attention(x, ln_w, wq, wk, wv, wo, pos_bias):
    """x: (B, S, D); wq/wk/wv: (INNER, D) torch Linear layout; wo: (D, INNER);
    pos_bias: (H, S, S)."""
    B, S, D = x.shape
    # The (D, 3*INNER + D) packed slab relies on INNER == D_MODEL (true for
    # this config); otherwise pass wo.T separately.
    assert D == D_MODEL and INNER == D_MODEL

    # Host-side weight packing:
    #   columns [0, 3*INNER): ln-gain-folded Q/K/V projection (D, 3*INNER)
    #   columns [3*INNER, 3*INNER+D): output projection W_o^T (INNER, D)
    w_qkv = jnp.concatenate([wq.T, wk.T, wv.T], axis=1)      # (D, 3*INNER)
    w_qkv = ln_w[:, None] * w_qkv                            # fold RMSNorm gain
    w_all = jnp.concatenate([w_qkv, wo.T], axis=1)           # (D, 128) lane-dense

    x2 = x.reshape(B * S, D)     # fold batch -> one 2D row block

    out2 = pl.pallas_call(
        t5_self_attn_kernel,
        out_shape=jax.ShapeDtypeStruct((B * S, D), x.dtype),
        # No grid: whole problem (a few KB) is a single VMEM-resident block.
        in_specs=[
            pl.BlockSpec(memory_space=pltpu.MemorySpace.VMEM),
            pl.BlockSpec(memory_space=pltpu.MemorySpace.VMEM),
            pl.BlockSpec(memory_space=pltpu.MemorySpace.VMEM),
        ],
        out_specs=pl.BlockSpec(memory_space=pltpu.MemorySpace.VMEM),
    )(x2, w_all, pos_bias)

    return out2.reshape(B, S, D)


# ---------------------- relative position bias (glue) -----------------------
def _relative_position_bucket(rel_pos, bidirectional, num_buckets, max_distance):
    relative_buckets = jnp.zeros_like(rel_pos)
    if bidirectional:
        num_buckets //= 2
        relative_buckets = relative_buckets + (rel_pos > 0).astype(jnp.int32) * num_buckets
        rel_pos = jnp.abs(rel_pos)
    else:
        rel_pos = -jnp.minimum(rel_pos, 0)
    max_exact = num_buckets // 2
    is_small = rel_pos < max_exact
    # Clamp to >= 1 before the log: the rel_pos==0 entries are masked out by
    # jnp.where below, but log(0) -> -inf -> int cast is UB / NaN-debug noise.
    rel_pos_f = jnp.maximum(rel_pos.astype(jnp.float32), 1.0)
    rel_if_large = max_exact + (
        jnp.log(rel_pos_f / max_exact)
        / math.log(max_distance / max_exact)
        * (num_buckets - max_exact)
    ).astype(jnp.int32)
    rel_if_large = jnp.minimum(rel_if_large, num_buckets - 1)
    return relative_buckets + jnp.where(is_small, rel_pos, rel_if_large)


def compute_position_bias(rel_emb, len_q, len_k):
    """rel_emb: (NUM_BUCKETS, NUM_HEADS) embedding table -> (H, len_q, len_k)."""
    ctx = jnp.arange(len_q, dtype=jnp.int32)[:, None]
    mem = jnp.arange(len_k, dtype=jnp.int32)[None, :]
    rel_pos = mem - ctx
    buckets = _relative_position_bucket(
        rel_pos, bidirectional=not IS_DECODER,
        num_buckets=NUM_BUCKETS, max_distance=MAX_DISTANCE)
    bias = rel_emb[buckets]                  # (len_q, len_k, H)
    return jnp.transpose(bias, (2, 0, 1))    # (H, len_q, len_k)


# ------------------------------ JAX reference -------------------------------
def reference(x, ln_w, wq, wk, wv, wo, pos_bias):
    var = jnp.mean(x.astype(jnp.float32) ** 2, axis=-1, keepdims=True)
    h = (x * jax.lax.rsqrt(var + LN_EPS)) * ln_w
    q = h @ wq.T
    k = h @ wk.T
    v = h @ wv.T
    B, S, _ = x.shape
    q = q.reshape(B, S, NUM_HEADS, D_KV).transpose(0, 2, 1, 3)
    k = k.reshape(B, S, NUM_HEADS, D_KV).transpose(0, 2, 1, 3)
    v = v.reshape(B, S, NUM_HEADS, D_KV).transpose(0, 2, 1, 3)
    scores = jnp.einsum("bhqd,bhkd->bhqk", q, k) + pos_bias[None]
    attn = jax.nn.softmax(scores.astype(jnp.float32), axis=-1)
    out = jnp.einsum("bhqk,bhkd->bhqd", attn, v)
    out = out.transpose(0, 2, 1, 3).reshape(B, S, INNER)
    return x + out @ wo.T


# ---------------------------------- main ------------------------------------
if __name__ == "__main__":
    key = jax.random.PRNGKey(0)
    ks = jax.random.split(key, 6)

    x = jax.random.normal(ks[0], (BATCH, SEQ, D_MODEL), dtype=jnp.float32)

    # deterministic parameter init (synthetic weights, torch Linear layout)
    wq = jax.random.normal(ks[1], (INNER, D_MODEL), dtype=jnp.float32) * 0.05
    wk = jax.random.normal(ks[2], (INNER, D_MODEL), dtype=jnp.float32) * 0.05
    wv = jax.random.normal(ks[3], (INNER, D_MODEL), dtype=jnp.float32) * 0.05
    wo = jax.random.normal(ks[4], (D_MODEL, INNER), dtype=jnp.float32) * 0.05
    ln_w = jnp.ones((D_MODEL,), dtype=jnp.float32)
    rel_emb = jax.random.normal(ks[5], (NUM_BUCKETS, NUM_HEADS),
                                dtype=jnp.float32) * 0.05

    # relative position bias (bias_cal path; type/row/col ids not supplied)
    pos_bias = compute_position_bias(rel_emb, SEQ, SEQ)

    out = t5_layer_self_attention(x, ln_w, wq, wk, wv, wo, pos_bias)
    out = jax.block_until_ready(out)

    ref = reference(x, ln_w, wq, wk, wv, wo, pos_bias)
    assert jnp.allclose(out, ref, rtol=1e-4, atol=1e-5), "mismatch vs reference"

    # TODO(synk): train-mode dropout and the KV-cache / cross-attention /
    # attention-mask paths of T5Attention.go_next are not exercised (eval,
    # no past_key_value, no mask).
    print("KERNEL_OK")
</pallas_src>

<mosaic_0001>
module attributes {stable_mosaic.version = 11 : i64} {
  func.func @t5_self_attn_kernel(%arg0: memref<16x32xf32, #tpu.memory_space<vmem>>, %arg1: memref<32x128xf32, #tpu.memory_space<vmem>>, %arg2: memref<4x8x8xf32, #tpu.memory_space<vmem>>, %arg3: memref<16x32xf32, #tpu.memory_space<vmem>>) attributes {dimension_semantics = [], scalar_prefetch = 0 : i64, scratch_operands = 0 : i64, tpu.core_type = #tpu.core_type<tc>} {
    %c0 = arith.constant 0 : index
    %c0_0 = arith.constant 0 : index
    %0 = vector.load %arg0[%c0, %c0_0] : memref<16x32xf32, #tpu.memory_space<vmem>>, vector<16x32xf32>
    %1 = arith.mulf %0, %0 : vector<16x32xf32>
    %cst = arith.constant dense<0.000000e+00> : vector<16xf32>
    %2 = vector.multi_reduction <add>, %1, %cst [1] : vector<16x32xf32> to vector<16xf32>
    %3 = vector.shape_cast %2 : vector<16xf32> to vector<16x1xf32>
    %cst_1 = arith.constant 3.200000e+01 : f32
    %4 = vector.broadcast %cst_1 : f32 to vector<16x1xf32>
    %5 = arith.divf %3, %4 : vector<16x1xf32>
    %cst_2 = arith.constant 9.99999997E-7 : f32
    %6 = vector.broadcast %cst_2 : f32 to vector<16x1xf32>
    %7 = arith.addf %5, %6 : vector<16x1xf32>
    %8 = math.rsqrt %7 : vector<16x1xf32>
    %9 = vector.broadcast %8 : vector<16x1xf32> to vector<16x32xf32>
    %10 = arith.mulf %0, %9 : vector<16x32xf32>
    %c0_3 = arith.constant 0 : index
    %c0_4 = arith.constant 0 : index
    %11 = vector.load %arg1[%c0_3, %c0_4] : memref<32x128xf32, #tpu.memory_space<vmem>>, vector<32x128xf32>
    %12 = vector.extract_strided_slice %11 {offsets = [0, 0], sizes = [32, 96], strides = [1, 1]} : vector<32x128xf32> to vector<32x96xf32>
    %13 = vector.extract_strided_slice %11 {offsets = [0, 96], sizes = [32, 32], strides = [1, 1]} : vector<32x128xf32> to vector<32x32xf32>
    %cst_5 = arith.constant dense<0.000000e+00> : vector<16x96xf32>
    %14 = tpu.matmul %10, %12, %cst_5 {dimension_numbers = #tpu.dot_dimension_numbers<[1], [0], [0], [1], [0, 0, 1, 1], [], []>} : vector<16x32xf32>, vector<32x96xf32>, vector<16x96xf32> -> vector<16x96xf32>
    %15 = vector.extract_strided_slice %14 {offsets = [0, 0], sizes = [16, 8], strides = [1, 1]} : vector<16x96xf32> to vector<16x8xf32>
    %16 = vector.extract_strided_slice %14 {offsets = [0, 32], sizes = [16, 8], strides = [1, 1]} : vector<16x96xf32> to vector<16x8xf32>
    %17 = vector.extract_strided_slice %14 {offsets = [0, 64], sizes = [16, 8], strides = [1, 1]} : vector<16x96xf32> to vector<16x8xf32>
    %c0_6 = arith.constant 0 : index
    %c0_7 = arith.constant 0 : index
    %c0_8 = arith.constant 0 : index
    %18 = vector.load %arg2[%c0_6, %c0_7, %c0_8] : memref<4x8x8xf32, #tpu.memory_space<vmem>>, vector<1x8x8xf32>
    %19 = vector.shape_cast %18 : vector<1x8x8xf32> to vector<8x8xf32>
    %20 = vector.extract_strided_slice %15 {offsets = [0, 0], sizes = [8, 8], strides = [1, 1]} : vector<16x8xf32> to vector<8x8xf32>
    %21 = vector.extract_strided_slice %16 {offsets = [0, 0], sizes = [8, 8], strides = [1, 1]} : vector<16x8xf32> to vector<8x8xf32>
    %22 = vector.extract_strided_slice %17 {offsets = [0, 0], sizes = [8, 8], strides = [1, 1]} : vector<16x8xf32> to vector<8x8xf32>
    %23 = tpu.transpose %21, [1, 0] : vector<8x8xf32> -> vector<8x8xf32>
    %cst_9 = arith.constant dense<0.000000e+00> : vector<8x8xf32>
    %24 = tpu.matmul %20, %23, %cst_9 {dimension_numbers = #tpu.dot_dimension_numbers<[1], [0], [0], [1], [0, 0, 1, 1], [], []>} : vector<8x8xf32>, vector<8x8xf32>, vector<8x8xf32> -> vector<8x8xf32>
    %25 = arith.addf %24, %19 : vector<8x8xf32>
    %cst_10 = arith.constant dense<0xFF800000> : vector<8xf32>
    %26 = vector.multi_reduction <maximumf>, %25, %cst_10 [1] : vector<8x8xf32> to vector<8xf32>
    %27 = vector.shape_cast %26 : vector<8xf32> to vector<8x1xf32>
    %28 = vector.broadcast %27 : vector<8x1xf32> to vector<8x8xf32>
    %29 = arith.subf %25, %28 : vector<8x8xf32>
    %30 = math.exp %29 : vector<8x8xf32>
    %cst_11 = arith.constant dense<0.000000e+00> : vector<8xf32>
    %31 = vector.multi_reduction <add>, %30, %cst_11 [1] : vector<8x8xf32> to vector<8xf32>
    %32 = vector.shape_cast %31 : vector<8xf32> to vector<8x1xf32>
    %cst_12 = arith.constant dense<0.000000e+00> : vector<8x8xf32>
    %33 = tpu.matmul %30, %22, %cst_12 {dimension_numbers = #tpu.dot_dimension_numbers<[1], [0], [0], [1], [0, 0, 1, 1], [], []>} : vector<8x8xf32>, vector<8x8xf32>, vector<8x8xf32> -> vector<8x8xf32>
    %34 = tpu.reciprocal %32 {approx = true} : vector<8x1xf32> -> vector<8x1xf32>
    %35 = arith.mulf %32, %34 : vector<8x1xf32>
    %cst_13 = arith.constant 2.000000e+00 : f32
    %36 = vector.broadcast %cst_13 : f32 to vector<8x1xf32>
    %37 = arith.subf %36, %35 : vector<8x1xf32>
    %38 = arith.mulf %34, %37 : vector<8x1xf32>
    %39 = vector.broadcast %38 : vector<8x1xf32> to vector<8x8xf32>
    %40 = arith.mulf %33, %39 : vector<8x8xf32>
    %41 = vector.extract_strided_slice %15 {offsets = [8, 0], sizes = [8, 8], strides = [1, 1]} : vector<16x8xf32> to vector<8x8xf32>
    %42 = vector.extract_strided_slice %16 {offsets = [8, 0], sizes = [8, 8], strides = [1, 1]} : vector<16x8xf32> to vector<8x8xf32>
    %43 = vector.extract_strided_slice %17 {offsets = [8, 0], sizes = [8, 8], strides = [1, 1]} : vector<16x8xf32> to vector<8x8xf32>
    %44 = tpu.transpose %42, [1, 0] : vector<8x8xf32> -> vector<8x8xf32>
    %cst_14 = arith.constant dense<0.000000e+00> : vector<8x8xf32>
    %45 = tpu.matmul %41, %44, %cst_14 {dimension_numbers = #tpu.dot_dimension_numbers<[1], [0], [0], [1], [0, 0, 1, 1], [], []>} : vector<8x8xf32>, vector<8x8xf32>, vector<8x8xf32> -> vector<8x8xf32>
    %46 = arith.addf %45, %19 : vector<8x8xf32>
    %cst_15 = arith.constant dense<0xFF800000> : vector<8xf32>
    %47 = vector.multi_reduction <maximumf>, %46, %cst_15 [1] : vector<8x8xf32> to vector<8xf32>
    %48 = vector.shape_cast %47 : vector<8xf32> to vector<8x1xf32>
    %49 = vector.broadcast %48 : vector<8x1xf32> to vector<8x8xf32>
    %50 = arith.subf %46, %49 : vector<8x8xf32>
    %51 = math.exp %50 : vector<8x8xf32>
    %cst_16 = arith.constant dense<0.000000e+00> : vector<8xf32>
    %52 = vector.multi_reduction <add>, %51, %cst_16 [1] : vector<8x8xf32> to vector<8xf32>
    %53 = vector.shape_cast %52 : vector<8xf32> to vector<8x1xf32>
    %cst_17 = arith.constant dense<0.000000e+00> : vector<8x8xf32>
    %54 = tpu.matmul %51, %43, %cst_17 {dimension_numbers = #tpu.dot_dimension_numbers<[1], [0], [0], [1], [0, 0, 1, 1], [], []>} : vector<8x8xf32>, vector<8x8xf32>, vector<8x8xf32> -> vector<8x8xf32>
    %55 = tpu.reciprocal %53 {approx = true} : vector<8x1xf32> -> vector<8x1xf32>
    %56 = arith.mulf %53, %55 : vector<8x1xf32>
    %cst_18 = arith.constant 2.000000e+00 : f32
    %57 = vector.broadcast %cst_18 : f32 to vector<8x1xf32>
    %58 = arith.subf %57, %56 : vector<8x1xf32>
    %59 = arith.mulf %55, %58 : vector<8x1xf32>
    %60 = vector.broadcast %59 : vector<8x1xf32> to vector<8x8xf32>
    %61 = arith.mulf %54, %60 : vector<8x8xf32>
    %62 = tpu.concatenate %40, %61 in 0 : vector<8x8xf32>, vector<8x8xf32> -> vector<16x8xf32>
    %63 = vector.extract_strided_slice %14 {offsets = [0, 8], sizes = [16, 8], strides = [1, 1]} : vector<16x96xf32> to vector<16x8xf32>
    %64 = vector.extract_strided_slice %14 {offsets = [0, 40], sizes = [16, 8], strides = [1, 1]} : vector<16x96xf32> to vector<16x8xf32>
    %65 = vector.extract_strided_slice %14 {offsets = [0, 72], sizes = [16, 8], strides = [1, 1]} : vector<16x96xf32> to vector<16x8xf32>
    %c1 = arith.constant 1 : index
    %c0_19 = arith.constant 0 : index
    %c0_20 = arith.constant 0 : index
    %66 = vector.load %arg2[%c1, %c0_19, %c0_20] : memref<4x8x8xf32, #tpu.memory_space<vmem>>, vector<1x8x8xf32>
    %67 = vector.shape_cast %66 : vector<1x8x8xf32> to vector<8x8xf32>
    %68 = vector.extract_strided_slice %63 {offsets = [0, 0], sizes = [8, 8], strides = [1, 1]} : vector<16x8xf32> to vector<8x8xf32>
    %69 = vector.extract_strided_slice %64 {offsets = [0, 0], sizes = [8, 8], strides = [1, 1]} : vector<16x8xf32> to vector<8x8xf32>
    %70 = vector.extract_strided_slice %65 {offsets = [0, 0], sizes = [8, 8], strides = [1, 1]} : vector<16x8xf32> to vector<8x8xf32>
    %71 = tpu.transpose %69, [1, 0] : vector<8x8xf32> -> vector<8x8xf32>
    %cst_21 = arith.constant dense<0.000000e+00> : vector<8x8xf32>
    %72 = tpu.matmul %68, %71, %cst_21 {dimension_numbers = #tpu.dot_dimension_numbers<[1], [0], [0], [1], [0, 0, 1, 1], [], []>} : vector<8x8xf32>, vector<8x8xf32>, vector<8x8xf32> -> vector<8x8xf32>
    %73 = arith.addf %72, %67 : vector<8x8xf32>
    %cst_22 = arith.constant dense<0xFF800000> : vector<8xf32>
    %74 = vector.multi_reduction <maximumf>, %73, %cst_22 [1] : vector<8x8xf32> to vector<8xf32>
    %75 = vector.shape_cast %74 : vector<8xf32> to vector<8x1xf32>
    %76 = vector.broadcast %75 : vector<8x1xf32> to vector<8x8xf32>
    %77 = arith.subf %73, %76 : vector<8x8xf32>
    %78 = math.exp %77 : vector<8x8xf32>
    %cst_23 = arith.constant dense<0.000000e+00> : vector<8xf32>
    %79 = vector.multi_reduction <add>, %78, %cst_23 [1] : vector<8x8xf32> to vector<8xf32>
    %80 = vector.shape_cast %79 : vector<8xf32> to vector<8x1xf32>
    %cst_24 = arith.constant dense<0.000000e+00> : vector<8x8xf32>
    %81 = tpu.matmul %78, %70, %cst_24 {dimension_numbers = #tpu.dot_dimension_numbers<[1], [0], [0], [1], [0, 0, 1, 1], [], []>} : vector<8x8xf32>, vector<8x8xf32>, vector<8x8xf32> -> vector<8x8xf32>
    %82 = tpu.reciprocal %80 {approx = true} : vector<8x1xf32> -> vector<8x1xf32>
    %83 = arith.mulf %80, %82 : vector<8x1xf32>
    %cst_25 = arith.constant 2.000000e+00 : f32
    %84 = vector.broadcast %cst_25 : f32 to vector<8x1xf32>
    %85 = arith.subf %84, %83 : vector<8x1xf32>
    %86 = arith.mulf %82, %85 : vector<8x1xf32>
    %87 = vector.broadcast %86 : vector<8x1xf32> to vector<8x8xf32>
    %88 = arith.mulf %81, %87 : vector<8x8xf32>
    %89 = vector.extract_strided_slice %63 {offsets = [8, 0], sizes = [8, 8], strides = [1, 1]} : vector<16x8xf32> to vector<8x8xf32>
    %90 = vector.extract_strided_slice %64 {offsets = [8, 0], sizes = [8, 8], strides = [1, 1]} : vector<16x8xf32> to vector<8x8xf32>
    %91 = vector.extract_strided_slice %65 {offsets = [8, 0], sizes = [8, 8], strides = [1, 1]} : vector<16x8xf32> to vector<8x8xf32>
    %92 = tpu.transpose %90, [1, 0] : vector<8x8xf32> -> vector<8x8xf32>
    %cst_26 = arith.constant dense<0.000000e+00> : vector<8x8xf32>
    %93 = tpu.matmul %89, %92, %cst_26 {dimension_numbers = #tpu.dot_dimension_numbers<[1], [0], [0], [1], [0, 0, 1, 1], [], []>} : vector<8x8xf32>, vector<8x8xf32>, vector<8x8xf32> -> vector<8x8xf32>
    %94 = arith.addf %93, %67 : vector<8x8xf32>
    %cst_27 = arith.constant dense<0xFF800000> : vector<8xf32>
    %95 = vector.multi_reduction <maximumf>, %94, %cst_27 [1] : vector<8x8xf32> to vector<8xf32>
    %96 = vector.shape_cast %95 : vector<8xf32> to vector<8x1xf32>
    %97 = vector.broadcast %96 : vector<8x1xf32> to vector<8x8xf32>
    %98 = arith.subf %94, %97 : vector<8x8xf32>
    %99 = math.exp %98 : vector<8x8xf32>
    %cst_28 = arith.constant dense<0.000000e+00> : vector<8xf32>
    %100 = vector.multi_reduction <add>, %99, %cst_28 [1] : vector<8x8xf32> to vector<8xf32>
    %101 = vector.shape_cast %100 : vector<8xf32> to vector<8x1xf32>
    %cst_29 = arith.constant dense<0.000000e+00> : vector<8x8xf32>
    %102 = tpu.matmul %99, %91, %cst_29 {dimension_numbers = #tpu.dot_dimension_numbers<[1], [0], [0], [1], [0, 0, 1, 1], [], []>} : vector<8x8xf32>, vector<8x8xf32>, vector<8x8xf32> -> vector<8x8xf32>
    %103 = tpu.reciprocal %101 {approx = true} : vector<8x1xf32> -> vector<8x1xf32>
    %104 = arith.mulf %101, %103 : vector<8x1xf32>
    %cst_30 = arith.constant 2.000000e+00 : f32
    %105 = vector.broadcast %cst_30 : f32 to vector<8x1xf32>
    %106 = arith.subf %105, %104 : vector<8x1xf32>
    %107 = arith.mulf %103, %106 : vector<8x1xf32>
    %108 = vector.broadcast %107 : vector<8x1xf32> to vector<8x8xf32>
    %109 = arith.mulf %102, %108 : vector<8x8xf32>
    %110 = tpu.concatenate %88, %109 in 0 : vector<8x8xf32>, vector<8x8xf32> -> vector<16x8xf32>
    %111 = vector.extract_strided_slice %14 {offsets = [0, 16], sizes = [16, 8], strides = [1, 1]} : vector<16x96xf32> to vector<16x8xf32>
    %112 = vector.extract_strided_slice %14 {offsets = [0, 48], sizes = [16, 8], strides = [1, 1]} : vector<16x96xf32> to vector<16x8xf32>
    %113 = vector.extract_strided_slice %14 {offsets = [0, 80], sizes = [16, 8], strides = [1, 1]} : vector<16x96xf32> to vector<16x8xf32>
    %c2 = arith.constant 2 : index
    %c0_31 = arith.constant 0 : index
    %c0_32 = arith.constant 0 : index
    %114 = vector.load %arg2[%c2, %c0_31, %c0_32] : memref<4x8x8xf32, #tpu.memory_space<vmem>>, vector<1x8x8xf32>
    %115 = vector.shape_cast %114 : vector<1x8x8xf32> to vector<8x8xf32>
    %116 = vector.extract_strided_slice %111 {offsets = [0, 0], sizes = [8, 8], strides = [1, 1]} : vector<16x8xf32> to vector<8x8xf32>
    %117 = vector.extract_strided_slice %112 {offsets = [0, 0], sizes = [8, 8], strides = [1, 1]} : vector<16x8xf32> to vector<8x8xf32>
    %118 = vector.extract_strided_slice %113 {offsets = [0, 0], sizes = [8, 8], strides = [1, 1]} : vector<16x8xf32> to vector<8x8xf32>
    %119 = tpu.transpose %117, [1, 0] : vector<8x8xf32> -> vector<8x8xf32>
    %cst_33 = arith.constant dense<0.000000e+00> : vector<8x8xf32>
    %120 = tpu.matmul %116, %119, %cst_33 {dimension_numbers = #tpu.dot_dimension_numbers<[1], [0], [0], [1], [0, 0, 1, 1], [], []>} : vector<8x8xf32>, vector<8x8xf32>, vector<8x8xf32> -> vector<8x8xf32>
    %121 = arith.addf %120, %115 : vector<8x8xf32>
    %cst_34 = arith.constant dense<0xFF800000> : vector<8xf32>
    %122 = vector.multi_reduction <maximumf>, %121, %cst_34 [1] : vector<8x8xf32> to vector<8xf32>
    %123 = vector.shape_cast %122 : vector<8xf32> to vector<8x1xf32>
    %124 = vector.broadcast %123 : vector<8x1xf32> to vector<8x8xf32>
    %125 = arith.subf %121, %124 : vector<8x8xf32>
    %126 = math.exp %125 : vector<8x8xf32>
    %cst_35 = arith.constant dense<0.000000e+00> : vector<8xf32>
    %127 = vector.multi_reduction <add>, %126, %cst_35 [1] : vector<8x8xf32> to vector<8xf32>
    %128 = vector.shape_cast %127 : vector<8xf32> to vector<8x1xf32>
    %cst_36 = arith.constant dense<0.000000e+00> : vector<8x8xf32>
    %129 = tpu.matmul %126, %118, %cst_36 {dimension_numbers = #tpu.dot_dimension_numbers<[1], [0], [0], [1], [0, 0, 1, 1], [], []>} : vector<8x8xf32>, vector<8x8xf32>, vector<8x8xf32> -> vector<8x8xf32>
    %130 = tpu.reciprocal %128 {approx = true} : vector<8x1xf32> -> vector<8x1xf32>
    %131 = arith.mulf %128, %130 : vector<8x1xf32>
    %cst_37 = arith.constant 2.000000e+00 : f32
    %132 = vector.broadcast %cst_37 : f32 to vector<8x1xf32>
    %133 = arith.subf %132, %131 : vector<8x1xf32>
    %134 = arith.mulf %130, %133 : vector<8x1xf32>
    %135 = vector.broadcast %134 : vector<8x1xf32> to vector<8x8xf32>
    %136 = arith.mulf %129, %135 : vector<8x8xf32>
    %137 = vector.extract_strided_slice %111 {offsets = [8, 0], sizes = [8, 8], strides = [1, 1]} : vector<16x8xf32> to vector<8x8xf32>
    %138 = vector.extract_strided_slice %112 {offsets = [8, 0], sizes = [8, 8], strides = [1, 1]} : vector<16x8xf32> to vector<8x8xf32>
    %139 = vector.extract_strided_slice %113 {offsets = [8, 0], sizes = [8, 8], strides = [1, 1]} : vector<16x8xf32> to vector<8x8xf32>
    %140 = tpu.transpose %138, [1, 0] : vector<8x8xf32> -> vector<8x8xf32>
    %cst_38 = arith.constant dense<0.000000e+00> : vector<8x8xf32>
    %141 = tpu.matmul %137, %140, %cst_38 {dimension_numbers = #tpu.dot_dimension_numbers<[1], [0], [0], [1], [0, 0, 1, 1], [], []>} : vector<8x8xf32>, vector<8x8xf32>, vector<8x8xf32> -> vector<8x8xf32>
    %142 = arith.addf %141, %115 : vector<8x8xf32>
    %cst_39 = arith.constant dense<0xFF800000> : vector<8xf32>
    %143 = vector.multi_reduction <maximumf>, %142, %cst_39 [1] : vector<8x8xf32> to vector<8xf32>
    %144 = vector.shape_cast %143 : vector<8xf32> to vector<8x1xf32>
    %145 = vector.broadcast %144 : vector<8x1xf32> to vector<8x8xf32>
    %146 = arith.subf %142, %145 : vector<8x8xf32>
    %147 = math.exp %146 : vector<8x8xf32>
    %cst_40 = arith.constant dense<0.000000e+00> : vector<8xf32>
    %148 = vector.multi_reduction <add>, %147, %cst_40 [1] : vector<8x8xf32> to vector<8xf32>
    %149 = vector.shape_cast %148 : vector<8xf32> to vector<8x1xf32>
    %cst_41 = arith.constant dense<0.000000e+00> : vector<8x8xf32>
    %150 = tpu.matmul %147, %139, %cst_41 {dimension_numbers = #tpu.dot_dimension_numbers<[1], [0], [0], [1], [0, 0, 1, 1], [], []>} : vector<8x8xf32>, vector<8x8xf32>, vector<8x8xf32> -> vector<8x8xf32>
    %151 = tpu.reciprocal %149 {approx = true} : vector<8x1xf32> -> vector<8x1xf32>
    %152 = arith.mulf %149, %151 : vector<8x1xf32>
    %cst_42 = arith.constant 2.000000e+00 : f32
    %153 = vector.broadcast %cst_42 : f32 to vector<8x1xf32>
    %154 = arith.subf %153, %152 : vector<8x1xf32>
    %155 = arith.mulf %151, %154 : vector<8x1xf32>
    %156 = vector.broadcast %155 : vector<8x1xf32> to vector<8x8xf32>
    %157 = arith.mulf %150, %156 : vector<8x8xf32>
    %158 = tpu.concatenate %136, %157 in 0 : vector<8x8xf32>, vector<8x8xf32> -> vector<16x8xf32>
    %159 = vector.extract_strided_slice %14 {offsets = [0, 24], sizes = [16, 8], strides = [1, 1]} : vector<16x96xf32> to vector<16x8xf32>
    %160 = vector.extract_strided_slice %14 {offsets = [0, 56], sizes = [16, 8], strides = [1, 1]} : vector<16x96xf32> to vector<16x8xf32>
    %161 = vector.extract_strided_slice %14 {offsets = [0, 88], sizes = [16, 8], strides = [1, 1]} : vector<16x96xf32> to vector<16x8xf32>
    %c3 = arith.constant 3 : index
    %c0_43 = arith.constant 0 : index
    %c0_44 = arith.constant 0 : index
    %162 = vector.load %arg2[%c3, %c0_43, %c0_44] : memref<4x8x8xf32, #tpu.memory_space<vmem>>, vector<1x8x8xf32>
    %163 = vector.shape_cast %162 : vector<1x8x8xf32> to vector<8x8xf32>
    %164 = vector.extract_strided_slice %159 {offsets = [0, 0], sizes = [8, 8], strides = [1, 1]} : vector<16x8xf32> to vector<8x8xf32>
    %165 = vector.extract_strided_slice %160 {offsets = [0, 0], sizes = [8, 8], strides = [1, 1]} : vector<16x8xf32> to vector<8x8xf32>
    %166 = vector.extract_strided_slice %161 {offsets = [0, 0], sizes = [8, 8], strides = [1, 1]} : vector<16x8xf32> to vector<8x8xf32>
    %167 = tpu.transpose %165, [1, 0] : vector<8x8xf32> -> vector<8x8xf32>
    %cst_45 = arith.constant dense<0.000000e+00> : vector<8x8xf32>
    %168 = tpu.matmul %164, %167, %cst_45 {dimension_numbers = #tpu.dot_dimension_numbers<[1], [0], [0], [1], [0, 0, 1, 1], [], []>} : vector<8x8xf32>, vector<8x8xf32>, vector<8x8xf32> -> vector<8x8xf32>
    %169 = arith.addf %168, %163 : vector<8x8xf32>
    %cst_46 = arith.constant dense<0xFF800000> : vector<8xf32>
    %170 = vector.multi_reduction <maximumf>, %169, %cst_46 [1] : vector<8x8xf32> to vector<8xf32>
    %171 = vector.shape_cast %170 : vector<8xf32> to vector<8x1xf32>
    %172 = vector.broadcast %171 : vector<8x1xf32> to vector<8x8xf32>
    %173 = arith.subf %169, %172 : vector<8x8xf32>
    %174 = math.exp %173 : vector<8x8xf32>
    %cst_47 = arith.constant dense<0.000000e+00> : vector<8xf32>
    %175 = vector.multi_reduction <add>, %174, %cst_47 [1] : vector<8x8xf32> to vector<8xf32>
    %176 = vector.shape_cast %175 : vector<8xf32> to vector<8x1xf32>
    %cst_48 = arith.constant dense<0.000000e+00> : vector<8x8xf32>
    %177 = tpu.matmul %174, %166, %cst_48 {dimension_numbers = #tpu.dot_dimension_numbers<[1], [0], [0], [1], [0, 0, 1, 1], [], []>} : vector<8x8xf32>, vector<8x8xf32>, vector<8x8xf32> -> vector<8x8xf32>
    %178 = tpu.reciprocal %176 {approx = true} : vector<8x1xf32> -> vector<8x1xf32>
    %179 = arith.mulf %176, %178 : vector<8x1xf32>
    %cst_49 = arith.constant 2.000000e+00 : f32
    %180 = vector.broadcast %cst_49 : f32 to vector<8x1xf32>
    %181 = arith.subf %180, %179 : vector<8x1xf32>
    %182 = arith.mulf %178, %181 : vector<8x1xf32>
    %183 = vector.broadcast %182 : vector<8x1xf32> to vector<8x8xf32>
    %184 = arith.mulf %177, %183 : vector<8x8xf32>
    %185 = vector.extract_strided_slice %159 {offsets = [8, 0], sizes = [8, 8], strides = [1, 1]} : vector<16x8xf32> to vector<8x8xf32>
    %186 = vector.extract_strided_slice %160 {offsets = [8, 0], sizes = [8, 8], strides = [1, 1]} : vector<16x8xf32> to vector<8x8xf32>
    %187 = vector.extract_strided_slice %161 {offsets = [8, 0], sizes = [8, 8], strides = [1, 1]} : vector<16x8xf32> to vector<8x8xf32>
    %188 = tpu.transpose %186, [1, 0] : vector<8x8xf32> -> vector<8x8xf32>
    %cst_50 = arith.constant dense<0.000000e+00> : vector<8x8xf32>
    %189 = tpu.matmul %185, %188, %cst_50 {dimension_numbers = #tpu.dot_dimension_numbers<[1], [0], [0], [1], [0, 0, 1, 1], [], []>} : vector<8x8xf32>, vector<8x8xf32>, vector<8x8xf32> -> vector<8x8xf32>
    %190 = arith.addf %189, %163 : vector<8x8xf32>
    %cst_51 = arith.constant dense<0xFF800000> : vector<8xf32>
    %191 = vector.multi_reduction <maximumf>, %190, %cst_51 [1] : vector<8x8xf32> to vector<8xf32>
    %192 = vector.shape_cast %191 : vector<8xf32> to vector<8x1xf32>
    %193 = vector.broadcast %192 : vector<8x1xf32> to vector<8x8xf32>
    %194 = arith.subf %190, %193 : vector<8x8xf32>
    %195 = math.exp %194 : vector<8x8xf32>
    %cst_52 = arith.constant dense<0.000000e+00> : vector<8xf32>
    %196 = vector.multi_reduction <add>, %195, %cst_52 [1] : vector<8x8xf32> to vector<8xf32>
    %197 = vector.shape_cast %196 : vector<8xf32> to vector<8x1xf32>
    %cst_53 = arith.constant dense<0.000000e+00> : vector<8x8xf32>
    %198 = tpu.matmul %195, %187, %cst_53 {dimension_numbers = #tpu.dot_dimension_numbers<[1], [0], [0], [1], [0, 0, 1, 1], [], []>} : vector<8x8xf32>, vector<8x8xf32>, vector<8x8xf32> -> vector<8x8xf32>
    %199 = tpu.reciprocal %197 {approx = true} : vector<8x1xf32> -> vector<8x1xf32>
    %200 = arith.mulf %197, %199 : vector<8x1xf32>
    %cst_54 = arith.constant 2.000000e+00 : f32
    %201 = vector.broadcast %cst_54 : f32 to vector<8x1xf32>
    %202 = arith.subf %201, %200 : vector<8x1xf32>
    %203 = arith.mulf %199, %202 : vector<8x1xf32>
    %204 = vector.broadcast %203 : vector<8x1xf32> to vector<8x8xf32>
    %205 = arith.mulf %198, %204 : vector<8x8xf32>
    %206 = tpu.concatenate %184, %205 in 0 : vector<8x8xf32>, vector<8x8xf32> -> vector<16x8xf32>
    %207 = tpu.concatenate %62, %110, %158, %206 in 1 : vector<16x8xf32>, vector<16x8xf32>, vector<16x8xf32>, vector<16x8xf32> -> vector<16x32xf32>
    %cst_55 = arith.constant dense<0.000000e+00> : vector<16x32xf32>
    %208 = tpu.matmul %207, %13, %cst_55 {dimension_numbers = #tpu.dot_dimension_numbers<[1], [0], [0], [1], [0, 0, 1, 1], [], []>} : vector<16x32xf32>, vector<32x32xf32>, vector<16x32xf32> -> vector<16x32xf32>
    %209 = arith.addf %0, %208 : vector<16x32xf32>
    %c0_56 = arith.constant 0 : index
    %c0_57 = arith.constant 0 : index
    %210 = vector.load %arg3[%c0_56, %c0_57] : memref<16x32xf32, #tpu.memory_space<vmem>>, vector<16x32xf32>
    tpu.vector_store %arg3[%c0_56, %c0_57], %209 {strides = array<i32>} : memref<16x32xf32, #tpu.memory_space<vmem>>, vector<16x32xf32>,
    return
  }
}

</mosaic_0001>

<llo_original>
// kernel: tpu_custom_call.1
$region0: #{tpu_custom_call.1}
  #allocation0 [shape = 'u32[]', space=smem, size = 0x4, offset = 0x4, fixed_abs, tag = 'smem constant byte address 0x4 - core index']
  #allocation1 [shape = 'u32[144,128]{1,0:T(1,128)}', space=vmem, size = 0x12000, scoped, tag = 'internal scratch']
  %s0 = inlined_call_operand.hbm [shape: f32[16,32], index: 0, kind: input, shape index: {}]
  %s1 = inlined_call_operand.hbm [shape: f32[32,128], index: 1, kind: input, shape index: {}]
  %s2 = inlined_call_operand.hbm [shape: f32[4,8,8], index: 2, kind: input, shape index: {}]
  %s3 = inlined_call_operand.hbm [shape: f32[16,32], index: 3, kind: output, shape index: {}]
  %s4 = sld [smem:[#allocation0]]
  $region34: #{tpu_custom_call.1} parent=0
    _
  %s6 = ssub.s32 1, %s4
  %s7 = scalar_select 0, %s6, %s4
  $region1: #{tpu_custom_call.1} parent=0
    #allocation2 [shape = 'u8[8192]{0}', space=vmem, size = 0x2000, scoped, tag = 'input window, operand 0, single buffered']
    #allocation3 [shape = 's32[1]{0}', space=sflag, size = 0x4, scoped, tag = 'scoped memory for tpu_custom_call.1']
    #allocation4 [shape = 's32[1]{0}', space=sflag, size = 0x4, scoped, tag = 'scoped memory for tpu_custom_call.1']
    #allocation5 [shape = 'u8[16384]{0}', space=vmem, size = 0x4000, scoped, tag = 'input window, operand 1, single buffered']
    #allocation6 [shape = 's32[1]{0}', space=sflag, size = 0x4, scoped, tag = 'scoped memory for tpu_custom_call.1']
    #allocation7 [shape = 'u8[16384]{0}', space=vmem, size = 0x4000, scoped, tag = 'input window, operand 2, single buffered']
    #allocation8 [shape = 'u8[8192]{0}', space=vmem, size = 0x2000, scoped, tag = 'output window, operand 0, single buffered']
    %8 = vsyncpa [#allocation3], 0
    %9 = vsyncpa [#allocation6], 0
    %10 = vsyncpa [#allocation4], 0
    // Predicated region
    $region2: #{tpu_custom_call.1} parent=1 // pred_check
      _
    $region3: #{tpu_custom_call.1} parent=1 // pred_check_branch
      %12 = sbr.rel (0) target = $region5
    $region4: #{tpu_custom_call.1} parent=1 // pred_region
      %s14 = ssub.s32 256, 256
      %15 = vsyncadd [#allocation3], %s14
      %s16 = sshll.u32 [#allocation2], 4
      %s17 = int_to_ptr.vmem [resolvable:$true] %s16
      %22 = dma.hbm_to_vmem [thread:$0]  %s0, 256, %s17, [#allocation3], 128, 128, 8
    $region5: #{tpu_custom_call.1} parent=1 // pred_fallthru
      _
    // Predicated region
    $region6: #{tpu_custom_call.1} parent=1 // pred_check
      _
    $region7: #{tpu_custom_call.1} parent=1 // pred_check_branch
      %24 = sbr.rel (0) target = $region9
    $region8: #{tpu_custom_call.1} parent=1 // pred_region
      %s26 = ssub.s32 512, 512
      %27 = vsyncadd [#allocation6], %s26
      %s28 = sshll.u32 [#allocation5], 4
      %s29 = int_to_ptr.vmem [resolvable:$true] %s28
      %34 = dma.hbm_to_vmem [thread:$0]  %s1, 512, %s29, [#allocation6], 128, 128, 8
    $region9: #{tpu_custom_call.1} parent=1 // pred_fallthru
      _
    // Predicated region
    $region10: #{tpu_custom_call.1} parent=1 // pred_check
      _
    $region11: #{tpu_custom_call.1} parent=1 // pred_check_branch
      %36 = sbr.rel (0) target = $region13
    $region12: #{tpu_custom_call.1} parent=1 // pred_region
      %s38 = ssub.s32 512, 512
      %39 = vsyncadd [#allocation6], %s38
      %s40 = sshll.u32 [#allocation7], 4
      %s41 = int_to_ptr.vmem [resolvable:$true] %s40
      %46 = dma.hbm_to_vmem [thread:$0]  %s2, 512, %s41, [#allocation6], 128, 128, 8
    $region13: #{tpu_custom_call.1} parent=1 // pred_fallthru
      _
    // Predicated region
    $region14: #{tpu_custom_call.1} parent=1 // pred_check
      _
    $region15: #{tpu_custom_call.1} parent=1 // pred_check_branch
      %48 = sbr.rel (0) target = $region17
    $region16: #{tpu_custom_call.1} parent=1 // pred_region
      %49 = dma.done [#allocation3], 256
    $region17: #{tpu_custom_call.1} parent=1 // pred_fallthru
      _
    // Predicated region
    $region18: #{tpu_custom_call.1} parent=1 // pred_check
      _
    $region19: #{tpu_custom_call.1} parent=1 // pred_check_branch
      %51 = sbr.rel (0) target = $region21
    $region20: #{tpu_custom_call.1} parent=1 // pred_region
      %52 = dma.done [#allocation6], 512
    $region21: #{tpu_custom_call.1} parent=1 // pred_fallthru
      _
    // Predicated region
    $region22: #{tpu_custom_call.1} parent=1 // pred_check
      _
    $region23: #{tpu_custom_call.1} parent=1 // pred_check_branch
      %54 = sbr.rel (0) target = $region25
    $region24: #{tpu_custom_call.1} parent=1 // pred_region
      %55 = dma.done [#allocation6], 512
    $region25: #{tpu_custom_call.1} parent=1 // pred_fallthru
      _
    %v56 = vld [vmem:[#allocation2] sm:$0xff]
    %v57 = vld [vmem:[#allocation2 + $0x8] sm:$0xff]
    %v58 = vmul.f32 %v56, %v56
    %v59 = vmul.f32 %v57, %v57
    %vm60 = vcmask 261120
    %v61 = vsel %vm60, %v58, 0.0
    %62 = vadd.xlane.f32.xlu0 %v61
    %v63 = vpop.xlane.xlu0 %62
    %v64 = vsel %vm60, %v59, 0.0
    %65 = vadd.xlane.f32.xlu0 %v64
    %v66 = vpop.xlane.xlu0 %65
    %v67 = vrcp.pop 32.0
    %v68 = vmul.f32 %v63, %v67
    %v69 = vmul.f32 %v66, %v67
    %v70 = vadd.f32 %v68, 1e-06
    %v71 = vadd.f32 %v69, 1e-06
    %v72 = vrsqrt.pop %v70
    %v73 = vrsqrt.pop %v71
    %v74 = vmul.f32 %v56, %v72
    %v75 = vmul.f32 %v57, %v73
    %v76 = vld [vmem:[#allocation5] sm:$0xff]
    %v77 = vld [vmem:[#allocation5 + $0x8] sm:$0xff]
    %v78 = vld [vmem:[#allocation5 + $0x10] sm:$0xff]
    %v79 = vld [vmem:[#allocation5 + $0x18] sm:$0xff]
    %v81 = vsel %vm60, %v74, 0
    %v84 = vsel %vm60, %v75, 0
    %86 = vmatprep.subr.mxu0 0.0
    %87 = vmatpush1.msra.mxu0 %v76
    %88 = vmatprep.subr.mxu0 0.0
    %89 = vmatpush1.msra.mxu0 %v77
    %90 = vmatprep.subr.mxu0 0.0
    %91 = vmatpush1.msra.mxu0 %v78
    %92 = vmatprep.subr.mxu0 0.0
    %93 = vmatpush1.msra.mxu0 %v79
    %94 = vmatprep.subr.mxu0 0.0
    %95 = vmatpush1.msra.mxu0 0.0
    %96 = vmatprep.subr.mxu0 0.0
    %97 = vmatpush1.msra.mxu0 0.0
    %98 = vmatprep.subr.mxu0 0.0
    %99 = vmatpush1.msra.mxu0 0.0
    %100 = vmatprep.subr.mxu0 0.0
    %101 = vmatpush1.msra.mxu0 0.0
    %102 = vmatprep.subr.mxu0 0.0
    %103 = vmatpush1.msra.mxu0 0.0
    %104 = vmatprep.subr.mxu0 0.0
    %105 = vmatpush1.msra.mxu0 0.0
    %106 = vmatprep.subr.mxu0 0.0
    %107 = vmatpush1.msra.mxu0 0.0
    %108 = vmatprep.subr.mxu0 0.0
    %109 = vmatpush1.msra.mxu0 0.0
    %110 = vmatprep.subr.mxu0 0.0
    %111 = vmatpush1.msra.mxu0 0.0
    %112 = vmatprep.subr.mxu0 0.0
    %113 = vmatpush1.msra.mxu0 0.0
    %114 = vmatprep.subr.mxu0 0.0
    %115 = vmatpush1.msra.mxu0 0.0
    %116 = vmatprep.subr.mxu0 0.0
    %117 = vmatpush1.msra.mxu0 0.0
    %118 = vmatprep.subr.mxu0 0.0
    %119 = vmatpush1.msra.mxu0 0.0
    %120 = vmatprep.subr.mxu0 0.0
    %121 = vmatpush1.msra.mxu0 0.0
    %122 = vmatprep.subr.mxu0 0.0
    %123 = vmatpush1.msra.mxu0 0.0
    %124 = vmatprep.subr.mxu0 0.0
    %125 = vmatpush1.msra.mxu0 0.0
    %126 = vmatprep.subr.mxu0 0.0
    %127 = vmatpush1.msra.mxu0 0.0
    %128 = vmatprep.subr.mxu0 0.0
    %129 = vmatpush1.msra.mxu0 0.0
    %130 = vmatprep.subr.mxu0 0.0
    %131 = vmatpush1.msra.mxu0 0.0
    %132 = vmatprep.subr.mxu0 0.0
    %133 = vmatpush1.msra.mxu0 0.0
    %134 = vmatprep.subr.mxu0 0.0
    %135 = vmatpush1.msra.mxu0 0.0
    %136 = vmatprep.subr.mxu0 0.0
    %137 = vmatpush1.msra.mxu0 0.0
    %138 = vmatprep.subr.mxu0 0.0
    %139 = vmatpush1.msra.mxu0 0.0
    %140 = vmatprep.subr.mxu0 0.0
    %141 = vmatpush1.msra.mxu0 0.0
    %142 = vmatprep.subr.mxu0 0.0
    %143 = vmatpush1.msra.mxu0 0.0
    %144 = vmatprep.subr.mxu0 0.0
    %145 = vmatpush1.msra.mxu0 0.0
    %146 = vmatprep.subr.mxu0 0.0
    %147 = vmatpush1.msra.mxu0 0.0
    %148 = vmatprep.subr.mxu0 0.0
    %149 = vmatpush1.msra.mxu0 0.0
    %150 = vmatprep.mubr.f32.mxu0 0.0
    %151 = vmatmul.mubr.f32.gmra.mrb[0].mxu0 %v81
    %v152 = vpop.f32.mrb[0].mxu0
    %v153 = vadd.f32 0.0, %v152
    %v154 = vpop.f32.mrb[0].mxu0
    %155 = vmatprep.mubr.f32.mxu0 0.0
    %156 = vmatmul.mubr.f32.gmra.mrb[0].mxu0 %v84
    %v157 = vpop.f32.mrb[0].mxu0
    %v158 = vadd.f32 0.0, %v157
    %v159 = vpop.f32.mrb[0].mxu0
    %160 = vdwg.mxu0
    %v161 = vld [vmem:[#allocation7] sm:$0xff]
    %163 = vrot.lane.b32.xlu0 %v153, 96
    %v164 = vpop.permute.xlu0 %163
    %vm165 = vcmask 64512
    %v166 = vsel %vm165, %v153, 0
    %v168 = vsel %vm165, %v164, 0
    %170 = vmatprep.subr.mxu0 0.0
    %171 = vmatpush1.xpose.msra.mxu0 %v168
    %172 = vmatprep.subr.mxu0 0.0
    %173 = vmatpush1.xpose.msra.mxu0 0.0
    %174 = vmatprep.subr.mxu0 0.0
    %175 = vmatpush1.xpose.msra.mxu0 0.0
    %176 = vmatprep.subr.mxu0 0.0
    %177 = vmatpush1.xpose.msra.mxu0 0.0
    %178 = vmatprep.subr.mxu0 0.0
    %179 = vmatpush1.xpose.msra.mxu0 0.0
    %180 = vmatprep.subr.mxu0 0.0
    %181 = vmatpush1.xpose.msra.mxu0 0.0
    %182 = vmatprep.subr.mxu0 0.0
    %183 = vmatpush1.xpose.msra.mxu0 0.0
    %184 = vmatprep.subr.mxu0 0.0
    %185 = vmatpush1.xpose.msra.mxu0 0.0
    %186 = vmatprep.subr.mxu0 0.0
    %187 = vmatpush1.xpose.msra.mxu0 0.0
    %188 = vmatprep.subr.mxu0 0.0
    %189 = vmatpush1.xpose.msra.mxu0 0.0
    %190 = vmatprep.subr.mxu0 0.0
    %191 = vmatpush1.xpose.msra.mxu0 0.0
    %192 = vmatprep.subr.mxu0 0.0
    %193 = vmatpush1.xpose.msra.mxu0 0.0
    %194 = vmatprep.subr.mxu0 0.0
    %195 = vmatpush1.xpose.msra.mxu0 0.0
    %196 = vmatprep.subr.mxu0 0.0
    %197 = vmatpush1.xpose.msra.mxu0 0.0
    %198 = vmatprep.subr.mxu0 0.0
    %199 = vmatpush1.xpose.msra.mxu0 0.0
    %200 = vmatprep.subr.mxu0 0.0
    %201 = vmatpush1.xpose.msra.mxu0 0.0
    %202 = vmatprep.subr.mxu0 0.0
    %203 = vmatpush1.xpose.msra.mxu0 0.0
    %204 = vmatprep.subr.mxu0 0.0
    %205 = vmatpush1.xpose.msra.mxu0 0.0
    %206 = vmatprep.subr.mxu0 0.0
    %207 = vmatpush1.xpose.msra.mxu0 0.0
    %208 = vmatprep.subr.mxu0 0.0
    %209 = vmatpush1.xpose.msra.mxu0 0.0
    %210 = vmatprep.subr.mxu0 0.0
    %211 = vmatpush1.xpose.msra.mxu0 0.0
    %212 = vmatprep.subr.mxu0 0.0
    %213 = vmatpush1.xpose.msra.mxu0 0.0
    %214 = vmatprep.subr.mxu0 0.0
    %215 = vmatpush1.xpose.msra.mxu0 0.0
    %216 = vmatprep.subr.mxu0 0.0
    %217 = vmatpush1.xpose.msra.mxu0 0.0
    %218 = vmatprep.subr.mxu0 0.0
    %219 = vmatpush1.xpose.msra.mxu0 0.0
    %220 = vmatprep.subr.mxu0 0.0
    %221 = vmatpush1.xpose.msra.mxu0 0.0
    %222 = vmatprep.subr.mxu0 0.0
    %223 = vmatpush1.xpose.msra.mxu0 0.0
    %224 = vmatprep.subr.mxu0 0.0
    %225 = vmatpush1.xpose.msra.mxu0 0.0
    %226 = vmatprep.subr.mxu0 0.0
    %227 = vmatpush1.xpose.msra.mxu0 0.0
    %228 = vmatprep.subr.mxu0 0.0
    %229 = vmatpush1.xpose.msra.mxu0 0.0
    %230 = vmatprep.subr.mxu0 0.0
    %231 = vmatpush1.xpose.msra.mxu0 0.0
    %232 = vmatprep.subr.mxu0 0.0
    %233 = vmatpush1.xpose.msra.mxu0 0.0
    %234 = vmatprep.mubr.f32.mxu0 0.0
    %235 = vmatmul.mubr.f32.gmra.mrb[0].mxu0 %v166
    %v236 = vpop.f32.mrb[0].mxu0
    %v237 = vadd.f32 %v161, %v236
    %v238 = vpop.f32.mrb[0].mxu0
    %239 = vdwg.mxu0
    %v240 = vsel %vm165, %v237, -inf
    %241 = vmax.xlane.f32.xlu0 %v240
    %v242 = vpop.xlane.xlu0 %241
    %v243 = vsub.f32 %v237, %v242
    %v244 = vmul.f32 %v243, 1.442695
    %v245 = vpow.pop %v244
    %v246 = vsel %vm165, %v245, 0.0
    %247 = vadd.xlane.f32.xlu0 %v246
    %v248 = vpop.xlane.xlu0 %247
    %249 = vrot.lane.b32.xlu0 %v153, 64
    %v250 = vpop.permute.xlu0 %249
    %v253 = vsel %vm165, %v245, 0
    %255 = vmatprep.subr.mxu0 0.0
    %256 = vmatpush1.msra.mxu0 %v250
    %257 = vmatprep.subr.mxu0 0.0
    %258 = vmatpush1.msra.mxu0 0.0
    %259 = vmatprep.subr.mxu0 0.0
    %260 = vmatpush1.msra.mxu0 0.0
    %261 = vmatprep.subr.mxu0 0.0
    %262 = vmatpush1.msra.mxu0 0.0
    %263 = vmatprep.subr.mxu0 0.0
    %264 = vmatpush1.msra.mxu0 0.0
    %265 = vmatprep.subr.mxu0 0.0
    %266 = vmatpush1.msra.mxu0 0.0
    %267 = vmatprep.subr.mxu0 0.0
    %268 = vmatpush1.msra.mxu0 0.0
    %269 = vmatprep.subr.mxu0 0.0
    %270 = vmatpush1.msra.mxu0 0.0
    %271 = vmatprep.subr.mxu0 0.0
    %272 = vmatpush1.msra.mxu0 0.0
    %273 = vmatprep.subr.mxu0 0.0
    %274 = vmatpush1.msra.mxu0 0.0
    %275 = vmatprep.subr.mxu0 0.0
    %276 = vmatpush1.msra.mxu0 0.0
    %277 = vmatprep.subr.mxu0 0.0
    %278 = vmatpush1.msra.mxu0 0.0
    %279 = vmatprep.subr.mxu0 0.0
    %280 = vmatpush1.msra.mxu0 0.0
    %281 = vmatprep.subr.mxu0 0.0
    %282 = vmatpush1.msra.mxu0 0.0
    %283 = vmatprep.subr.mxu0 0.0
    %284 = vmatpush1.msra.mxu0 0.0
    %285 = vmatprep.subr.mxu0 0.0
    %286 = vmatpush1.msra.mxu0 0.0
    %287 = vmatprep.subr.mxu0 0.0
    %288 = vmatpush1.msra.mxu0 0.0
    %289 = vmatprep.subr.mxu0 0.0
    %290 = vmatpush1.msra.mxu0 0.0
    %291 = vmatprep.subr.mxu0 0.0
    %292 = vmatpush1.msra.mxu0 0.0
    %293 = vmatprep.subr.mxu0 0.0
    %294 = vmatpush1.msra.mxu0 0.0
    %295 = vmatprep.subr.mxu0 0.0
    %296 = vmatpush1.msra.mxu0 0.0
    %297 = vmatprep.subr.mxu0 0.0
    %298 = vmatpush1.msra.mxu0 0.0
    %299 = vmatprep.subr.mxu0 0.0
    %300 = vmatpush1.msra.mxu0 0.0
    %301 = vmatprep.subr.mxu0 0.0
    %302 = vmatpush1.msra.mxu0 0.0
    %303 = vmatprep.subr.mxu0 0.0
    %304 = vmatpush1.msra.mxu0 0.0
    %305 = vmatprep.subr.mxu0 0.0
    %306 = vmatpush1.msra.mxu0 0.0
    %307 = vmatprep.subr.mxu0 0.0
    %308 = vmatpush1.msra.mxu0 0.0
    %309 = vmatprep.subr.mxu0 0.0
    %310 = vmatpush1.msra.mxu0 0.0
    %311 = vmatprep.subr.mxu0 0.0
    %312 = vmatpush1.msra.mxu0 0.0
    %313 = vmatprep.subr.mxu0 0.0
    %314 = vmatpush1.msra.mxu0 0.0
    %315 = vmatprep.subr.mxu0 0.0
    %316 = vmatpush1.msra.mxu0 0.0
    %317 = vmatprep.subr.mxu0 0.0
    %318 = vmatpush1.msra.mxu0 0.0
    %319 = vmatprep.mubr.f32.mxu0 0.0
    %320 = vmatmul.mubr.f32.gmra.mrb[0].mxu0 %v253
    %v321 = vpop.f32.mrb[0].mxu0
    %v322 = vadd.f32 0.0, %v321
    %v323 = vpop.f32.mrb[0].mxu0
    %324 = vdwg.mxu0
    %v325 = vrcp.pop %v248
    %v326 = vmul.f32 %v248, %v325
    %v327 = vsub.f32 2.0, %v326
    %v328 = vmul.f32 %v325, %v327
    %v329 = vmul.f32 %v322, %v328
    %331 = vrot.lane.b32.xlu0 %v158, 96
    %v332 = vpop.permute.xlu0 %331
    %v333 = vsel %vm165, %v158, 0
    %v335 = vsel %vm165, %v332, 0
    %337 = vmatprep.subr.mxu0 0.0
    %338 = vmatpush1.xpose.msra.mxu0 %v335
    %339 = vmatprep.subr.mxu0 0.0
    %340 = vmatpush1.xpose.msra.mxu0 0.0
    %341 = vmatprep.subr.mxu0 0.0
    %342 = vmatpush1.xpose.msra.mxu0 0.0
    %343 = vmatprep.subr.mxu0 0.0
    %344 = vmatpush1.xpose.msra.mxu0 0.0
    %345 = vmatprep.subr.mxu0 0.0
    %346 = vmatpush1.xpose.msra.mxu0 0.0
    %347 = vmatprep.subr.mxu0 0.0
    %348 = vmatpush1.xpose.msra.mxu0 0.0
    %349 = vmatprep.subr.mxu0 0.0
    %350 = vmatpush1.xpose.msra.mxu0 0.0
    %351 = vmatprep.subr.mxu0 0.0
    %352 = vmatpush1.xpose.msra.mxu0 0.0
    %353 = vmatprep.subr.mxu0 0.0
    %354 = vmatpush1.xpose.msra.mxu0 0.0
    %355 = vmatprep.subr.mxu0 0.0
    %356 = vmatpush1.xpose.msra.mxu0 0.0
    %357 = vmatprep.subr.mxu0 0.0
    %358 = vmatpush1.xpose.msra.mxu0 0.0
    %359 = vmatprep.subr.mxu0 0.0
    %360 = vmatpush1.xpose.msra.mxu0 0.0
    %361 = vmatprep.subr.mxu0 0.0
    %362 = vmatpush1.xpose.msra.mxu0 0.0
    %363 = vmatprep.subr.mxu0 0.0
    %364 = vmatpush1.xpose.msra.mxu0 0.0
    %365 = vmatprep.subr.mxu0 0.0
    %366 = vmatpush1.xpose.msra.mxu0 0.0
    %367 = vmatprep.subr.mxu0 0.0
    %368 = vmatpush1.xpose.msra.mxu0 0.0
    %369 = vmatprep.subr.mxu0 0.0
    %370 = vmatpush1.xpose.msra.mxu0 0.0
    %371 = vmatprep.subr.mxu0 0.0
    %372 = vmatpush1.xpose.msra.mxu0 0.0
    %373 = vmatprep.subr.mxu0 0.0
    %374 = vmatpush1.xpose.msra.mxu0 0.0
    %375 = vmatprep.subr.mxu0 0.0
    %376 = vmatpush1.xpose.msra.mxu0 0.0
    %377 = vmatprep.subr.mxu0 0.0
    %378 = vmatpush1.xpose.msra.mxu0 0.0
    %379 = vmatprep.subr.mxu0 0.0
    %380 = vmatpush1.xpose.msra.mxu0 0.0
    %381 = vmatprep.subr.mxu0 0.0
    %382 = vmatpush1.xpose.msra.mxu0 0.0
    %383 = vmatprep.subr.mxu0 0.0
    %384 = vmatpush1.xpose.msra.mxu0 0.0
    %385 = vmatprep.subr.mxu0 0.0
    %386 = vmatpush1.xpose.msra.mxu0 0.0
    %387 = vmatprep.subr.mxu0 0.0
    %388 = vmatpush1.xpose.msra.mxu0 0.0
    %389 = vmatprep.subr.mxu0 0.0
    %390 = vmatpush1.xpose.msra.mxu0 0.0
    %391 = vmatprep.subr.mxu0 0.0
    %392 = vmatpush1.xpose.msra.mxu0 0.0
    %393 = vmatprep.subr.mxu0 0.0
    %394 = vmatpush1.xpose.msra.mxu0 0.0
    %395 = vmatprep.subr.mxu0 0.0
    %396 = vmatpush1.xpose.msra.mxu0 0.0
    %397 = vmatprep.subr.mxu0 0.0
    %398 = vmatpush1.xpose.msra.mxu0 0.0
    %399 = vmatprep.subr.mxu0 0.0
    %400 = vmatpush1.xpose.msra.mxu0 0.0
    %401 = vmatprep.mubr.f32.mxu0 0.0
    %402 = vmatmul.mubr.f32.gmra.mrb[0].mxu0 %v333
    %v403 = vpop.f32.mrb[0].mxu0
    %v404 = vadd.f32 %v161, %v403
    %v405 = vpop.f32.mrb[0].mxu0
    %406 = vdwg.mxu0
    %v407 = vsel %vm165, %v404, -inf
    %408 = vmax.xlane.f32.xlu0 %v407
    %v409 = vpop.xlane.xlu0 %408
    %v410 = vsub.f32 %v404, %v409
    %v411 = vmul.f32 %v410, 1.442695
    %v412 = vpow.pop %v411
    %v413 = vsel %vm165, %v412, 0.0
    %414 = vadd.xlane.f32.xlu0 %v413
    %v415 = vpop.xlane.xlu0 %414
    %416 = vrot.lane.b32.xlu0 %v158, 64
    %v417 = vpop.permute.xlu0 %416
    %v420 = vsel %vm165, %v412, 0
    %422 = vmatprep.subr.mxu0 0.0
    %423 = vmatpush1.msra.mxu0 %v417
    %424 = vmatprep.subr.mxu0 0.0
    %425 = vmatpush1.msra.mxu0 0.0
    %426 = vmatprep.subr.mxu0 0.0
    %427 = vmatpush1.msra.mxu0 0.0
    %428 = vmatprep.subr.mxu0 0.0
    %429 = vmatpush1.msra.mxu0 0.0
    %430 = vmatprep.subr.mxu0 0.0
    %431 = vmatpush1.msra.mxu0 0.0
    %432 = vmatprep.subr.mxu0 0.0
    %433 = vmatpush1.msra.mxu0 0.0
    %434 = vmatprep.subr.mxu0 0.0
    %435 = vmatpush1.msra.mxu0 0.0
    %436 = vmatprep.subr.mxu0 0.0
    %437 = vmatpush1.msra.mxu0 0.0
    %438 = vmatprep.subr.mxu0 0.0
    %439 = vmatpush1.msra.mxu0 0.0
    %440 = vmatprep.subr.mxu0 0.0
    %441 = vmatpush1.msra.mxu0 0.0
    %442 = vmatprep.subr.mxu0 0.0
    %443 = vmatpush1.msra.mxu0 0.0
    %444 = vmatprep.subr.mxu0 0.0
    %445 = vmatpush1.msra.mxu0 0.0
    %446 = vmatprep.subr.mxu0 0.0
    %447 = vmatpush1.msra.mxu0 0.0
    %448 = vmatprep.subr.mxu0 0.0
    %449 = vmatpush1.msra.mxu0 0.0
    %450 = vmatprep.subr.mxu0 0.0
    %451 = vmatpush1.msra.mxu0 0.0
    %452 = vmatprep.subr.mxu0 0.0
    %453 = vmatpush1.msra.mxu0 0.0
    %454 = vmatprep.subr.mxu0 0.0
    %455 = vmatpush1.msra.mxu0 0.0
    %456 = vmatprep.subr.mxu0 0.0
    %457 = vmatpush1.msra.mxu0 0.0
    %458 = vmatprep.subr.mxu0 0.0
    %459 = vmatpush1.msra.mxu0 0.0
    %460 = vmatprep.subr.mxu0 0.0
    %461 = vmatpush1.msra.mxu0 0.0
    %462 = vmatprep.subr.mxu0 0.0
    %463 = vmatpush1.msra.mxu0 0.0
    %464 = vmatprep.subr.mxu0 0.0
    %465 = vmatpush1.msra.mxu0 0.0
    %466 = vmatprep.subr.mxu0 0.0
    %467 = vmatpush1.msra.mxu0 0.0
    %468 = vmatprep.subr.mxu0 0.0
    %469 = vmatpush1.msra.mxu0 0.0
    %470 = vmatprep.subr.mxu0 0.0
    %471 = vmatpush1.msra.mxu0 0.0
    %472 = vmatprep.subr.mxu0 0.0
    %473 = vmatpush1.msra.mxu0 0.0
    %474 = vmatprep.subr.mxu0 0.0
    %475 = vmatpush1.msra.mxu0 0.0
    %476 = vmatprep.subr.mxu0 0.0
    %477 = vmatpush1.msra.mxu0 0.0
    %478 = vmatprep.subr.mxu0 0.0
    %479 = vmatpush1.msra.mxu0 0.0
    %480 = vmatprep.subr.mxu0 0.0
    %481 = vmatpush1.msra.mxu0 0.0
    %482 = vmatprep.subr.mxu0 0.0
    %483 = vmatpush1.msra.mxu0 0.0
    %484 = vmatprep.subr.mxu0 0.0
    %485 = vmatpush1.msra.mxu0 0.0
    %486 = vmatprep.mubr.f32.mxu0 0.0
    %487 = vmatmul.mubr.f32.gmra.mrb[0].mxu0 %v420
    %v488 = vpop.f32.mrb[0].mxu0
    %v489 = vadd.f32 0.0, %v488
    %v490 = vpop.f32.mrb[0].mxu0
    %491 = vdwg.mxu0
    %v492 = vrcp.pop %v415
    %v493 = vmul.f32 %v415, %v492
    %v494 = vsub.f32 2.0, %v493
    %v495 = vmul.f32 %v492, %v494
    %v496 = vmul.f32 %v489, %v495
    %s497 = scalar_lea.vmem [#allocation7], 8
    %v498 = vld [vmem:[%s497] sm:$0xff]
    %499 = vrot.lane.b32.xlu0 %v153, 120
    %v500 = vpop.permute.xlu0 %499
    %501 = vrot.lane.b32.xlu0 %v153, 88
    %v502 = vpop.permute.xlu0 %501
    %v503 = vsel %vm165, %v500, 0
    %v505 = vsel %vm165, %v502, 0
    %507 = vmatprep.subr.mxu0 0.0
    %508 = vmatpush1.xpose.msra.mxu0 %v505
    %509 = vmatprep.subr.mxu0 0.0
    %510 = vmatpush1.xpose.msra.mxu0 0.0
    %511 = vmatprep.subr.mxu0 0.0
    %512 = vmatpush1.xpose.msra.mxu0 0.0
    %513 = vmatprep.subr.mxu0 0.0
    %514 = vmatpush1.xpose.msra.mxu0 0.0
    %515 = vmatprep.subr.mxu0 0.0
    %516 = vmatpush1.xpose.msra.mxu0 0.0
    %517 = vmatprep.subr.mxu0 0.0
    %518 = vmatpush1.xpose.msra.mxu0 0.0
    %519 = vmatprep.subr.mxu0 0.0
    %520 = vmatpush1.xpose.msra.mxu0 0.0
    %521 = vmatprep.subr.mxu0 0.0
    %522 = vmatpush1.xpose.msra.mxu0 0.0
    %523 = vmatprep.subr.mxu0 0.0
    %524 = vmatpush1.xpose.msra.mxu0 0.0
    %525 = vmatprep.subr.mxu0 0.0
    %526 = vmatpush1.xpose.msra.mxu0 0.0
    %527 = vmatprep.subr.mxu0 0.0
    %528 = vmatpush1.xpose.msra.mxu0 0.0
    %529 = vmatprep.subr.mxu0 0.0
    %530 = vmatpush1.xpose.msra.mxu0 0.0
    %531 = vmatprep.subr.mxu0 0.0
    %532 = vmatpush1.xpose.msra.mxu0 0.0
    %533 = vmatprep.subr.mxu0 0.0
    %534 = vmatpush1.xpose.msra.mxu0 0.0
    %535 = vmatprep.subr.mxu0 0.0
    %536 = vmatpush1.xpose.msra.mxu0 0.0
    %537 = vmatprep.subr.mxu0 0.0
    %538 = vmatpush1.xpose.msra.mxu0 0.0
    %539 = vmatprep.subr.mxu0 0.0
    %540 = vmatpush1.xpose.msra.mxu0 0.0
    %541 = vmatprep.subr.mxu0 0.0
    %542 = vmatpush1.xpose.msra.mxu0 0.0
    %543 = vmatprep.subr.mxu0 0.0
    %544 = vmatpush1.xpose.msra.mxu0 0.0
    %545 = vmatprep.subr.mxu0 0.0
    %546 = vmatpush1.xpose.msra.mxu0 0.0
    %547 = vmatprep.subr.mxu0 0.0
    %548 = vmatpush1.xpose.msra.mxu0 0.0
    %549 = vmatprep.subr.mxu0 0.0
    %550 = vmatpush1.xpose.msra.mxu0 0.0
    %551 = vmatprep.subr.mxu0 0.0
    %552 = vmatpush1.xpose.msra.mxu0 0.0
    %553 = vmatprep.subr.mxu0 0.0
    %554 = vmatpush1.xpose.msra.mxu0 0.0
    %555 = vmatprep.subr.mxu0 0.0
    %556 = vmatpush1.xpose.msra.mxu0 0.0
    %557 = vmatprep.subr.mxu0 0.0
    %558 = vmatpush1.xpose.msra.mxu0 0.0
    %559 = vmatprep.subr.mxu0 0.0
    %560 = vmatpush1.xpose.msra.mxu0 0.0
    %561 = vmatprep.subr.mxu0 0.0
    %562 = vmatpush1.xpose.msra.mxu0 0.0
    %563 = vmatprep.subr.mxu0 0.0
    %564 = vmatpush1.xpose.msra.mxu0 0.0
    %565 = vmatprep.subr.mxu0 0.0
    %566 = vmatpush1.xpose.msra.mxu0 0.0
    %567 = vmatprep.subr.mxu0 0.0
    %568 = vmatpush1.xpose.msra.mxu0 0.0
    %569 = vmatprep.subr.mxu0 0.0
    %570 = vmatpush1.xpose.msra.mxu0 0.0
    %571 = vmatprep.mubr.f32.mxu0 0.0
    %572 = vmatmul.mubr.f32.gmra.mrb[0].mxu0 %v503
    %v573 = vpop.f32.mrb[0].mxu0
    %v574 = vadd.f32 %v498, %v573
    %v575 = vpop.f32.mrb[0].mxu0
    %576 = vdwg.mxu0
    %v577 = vsel %vm165, %v574, -inf
    %578 = vmax.xlane.f32.xlu0 %v577
    %v579 = vpop.xlane.xlu0 %578
    %v580 = vsub.f32 %v574, %v579
    %v581 = vmul.f32 %v580, 1.442695
    %v582 = vpow.pop %v581
    %v583 = vsel %vm165, %v582, 0.0
    %584 = vadd.xlane.f32.xlu0 %v583
    %v585 = vpop.xlane.xlu0 %584
    %586 = vrot.lane.b32.xlu0 %v153, 56
    %v587 = vpop.permute.xlu0 %586
    %v590 = vsel %vm165, %v582, 0
    %592 = vmatprep.subr.mxu0 0.0
    %593 = vmatpush1.msra.mxu0 %v587
    %594 = vmatprep.subr.mxu0 0.0
    %595 = vmatpush1.msra.mxu0 0.0
    %596 = vmatprep.subr.mxu0 0.0
    %597 = vmatpush1.msra.mxu0 0.0
    %598 = vmatprep.subr.mxu0 0.0
    %599 = vmatpush1.msra.mxu0 0.0
    %600 = vmatprep.subr.mxu0 0.0
    %601 = vmatpush1.msra.mxu0 0.0
    %602 = vmatprep.subr.mxu0 0.0
    %603 = vmatpush1.msra.mxu0 0.0
    %604 = vmatprep.subr.mxu0 0.0
    %605 = vmatpush1.msra.mxu0 0.0
    %606 = vmatprep.subr.mxu0 0.0
    %607 = vmatpush1.msra.mxu0 0.0
    %608 = vmatprep.subr.mxu0 0.0
    %609 = vmatpush1.msra.mxu0 0.0
    %610 = vmatprep.subr.mxu0 0.0
    %611 = vmatpush1.msra.mxu0 0.0
    %612 = vmatprep.subr.mxu0 0.0
    %613 = vmatpush1.msra.mxu0 0.0
    %614 = vmatprep.subr.mxu0 0.0
    %615 = vmatpush1.msra.mxu0 0.0
    %616 = vmatprep.subr.mxu0 0.0
    %617 = vmatpush1.msra.mxu0 0.0
    %618 = vmatprep.subr.mxu0 0.0
    %619 = vmatpush1.msra.mxu0 0.0
    %620 = vmatprep.subr.mxu0 0.0
    %621 = vmatpush1.msra.mxu0 0.0
    %622 = vmatprep.subr.mxu0 0.0
    %623 = vmatpush1.msra.mxu0 0.0
    %624 = vmatprep.subr.mxu0 0.0
    %625 = vmatpush1.msra.mxu0 0.0
    %626 = vmatprep.subr.mxu0 0.0
    %627 = vmatpush1.msra.mxu0 0.0
    %628 = vmatprep.subr.mxu0 0.0
    %629 = vmatpush1.msra.mxu0 0.0
    %630 = vmatprep.subr.mxu0 0.0
    %631 = vmatpush1.msra.mxu0 0.0
    %632 = vmatprep.subr.mxu0 0.0
    %633 = vmatpush1.msra.mxu0 0.0
    %634 = vmatprep.subr.mxu0 0.0
    %635 = vmatpush1.msra.mxu0 0.0
    %636 = vmatprep.subr.mxu0 0.0
    %637 = vmatpush1.msra.mxu0 0.0
    %638 = vmatprep.subr.mxu0 0.0
    %639 = vmatpush1.msra.mxu0 0.0
    %640 = vmatprep.subr.mxu0 0.0
    %641 = vmatpush1.msra.mxu0 0.0
    %642 = vmatprep.subr.mxu0 0.0
    %643 = vmatpush1.msra.mxu0 0.0
    %644 = vmatprep.subr.mxu0 0.0
    %645 = vmatpush1.msra.mxu0 0.0
    %646 = vmatprep.subr.mxu0 0.0
    %647 = vmatpush1.msra.mxu0 0.0
    %648 = vmatprep.subr.mxu0 0.0
    %649 = vmatpush1.msra.mxu0 0.0
    %650 = vmatprep.subr.mxu0 0.0
    %651 = vmatpush1.msra.mxu0 0.0
    %652 = vmatprep.subr.mxu0 0.0
    %653 = vmatpush1.msra.mxu0 0.0
    %654 = vmatprep.subr.mxu0 0.0
    %655 = vmatpush1.msra.mxu0 0.0
    %656 = vmatprep.mubr.f32.mxu0 0.0
    %657 = vmatmul.mubr.f32.gmra.mrb[0].mxu0 %v590
    %v658 = vpop.f32.mrb[0].mxu0
    %v659 = vadd.f32 0.0, %v658
    %v660 = vpop.f32.mrb[0].mxu0
    %661 = vdwg.mxu0
    %v662 = vrcp.pop %v585
    %v663 = vmul.f32 %v585, %v662
    %v664 = vsub.f32 2.0, %v663
    %v665 = vmul.f32 %v662, %v664
    %v666 = vmul.f32 %v659, %v665
    %667 = vrot.lane.b32.xlu0 %v158, 120
    %v668 = vpop.permute.xlu0 %667
    %669 = vrot.lane.b32.xlu0 %v158, 88
    %v670 = vpop.permute.xlu0 %669
    %v671 = vsel %vm165, %v668, 0
    %v673 = vsel %vm165, %v670, 0
    %675 = vmatprep.subr.mxu0 0.0
    %676 = vmatpush1.xpose.msra.mxu0 %v673
    %677 = vmatprep.subr.mxu0 0.0
    %678 = vmatpush1.xpose.msra.mxu0 0.0
    %679 = vmatprep.subr.mxu0 0.0
    %680 = vmatpush1.xpose.msra.mxu0 0.0
    %681 = vmatprep.subr.mxu0 0.0
    %682 = vmatpush1.xpose.msra.mxu0 0.0
    %683 = vmatprep.subr.mxu0 0.0
    %684 = vmatpush1.xpose.msra.mxu0 0.0
    %685 = vmatprep.subr.mxu0 0.0
    %686 = vmatpush1.xpose.msra.mxu0 0.0
    %687 = vmatprep.subr.mxu0 0.0
    %688 = vmatpush1.xpose.msra.mxu0 0.0
    %689 = vmatprep.subr.mxu0 0.0
    %690 = vmatpush1.xpose.msra.mxu0 0.0
    %691 = vmatprep.subr.mxu0 0.0
    %692 = vmatpush1.xpose.msra.mxu0 0.0
    %693 = vmatprep.subr.mxu0 0.0
    %694 = vmatpush1.xpose.msra.mxu0 0.0
    %695 = vmatprep.subr.mxu0 0.0
    %696 = vmatpush1.xpose.msra.mxu0 0.0
    %697 = vmatprep.subr.mxu0 0.0
    %698 = vmatpush1.xpose.msra.mxu0 0.0
    %699 = vmatprep.subr.mxu0 0.0
    %700 = vmatpush1.xpose.msra.mxu0 0.0
    %701 = vmatprep.subr.mxu0 0.0
    %702 = vmatpush1.xpose.msra.mxu0 0.0
    %703 = vmatprep.subr.mxu0 0.0
    %704 = vmatpush1.xpose.msra.mxu0 0.0
    %705 = vmatprep.subr.mxu0 0.0
    %706 = vmatpush1.xpose.msra.mxu0 0.0
    %707 = vmatprep.subr.mxu0 0.0
    %708 = vmatpush1.xpose.msra.mxu0 0.0
    %709 = vmatprep.subr.mxu0 0.0
    %710 = vmatpush1.xpose.msra.mxu0 0.0
    %711 = vmatprep.subr.mxu0 0.0
    %712 = vmatpush1.xpose.msra.mxu0 0.0
    %713 = vmatprep.subr.mxu0 0.0
    %714 = vmatpush1.xpose.msra.mxu0 0.0
    %715 = vmatprep.subr.mxu0 0.0
    %716 = vmatpush1.xpose.msra.mxu0 0.0
    %717 = vmatprep.subr.mxu0 0.0
    %718 = vmatpush1.xpose.msra.mxu0 0.0
    %719 = vmatprep.subr.mxu0 0.0
    %720 = vmatpush1.xpose.msra.mxu0 0.0
    %721 = vmatprep.subr.mxu0 0.0
    %722 = vmatpush1.xpose.msra.mxu0 0.0
    %723 = vmatprep.subr.mxu0 0.0
    %724 = vmatpush1.xpose.msra.mxu0 0.0
    %725 = vmatprep.subr.mxu0 0.0
    %726 = vmatpush1.xpose.msra.mxu0 0.0
    %727 = vmatprep.subr.mxu0 0.0
    %728 = vmatpush1.xpose.msra.mxu0 0.0
    %729 = vmatprep.subr.mxu0 0.0
    %730 = vmatpush1.xpose.msra.mxu0 0.0
    %731 = vmatprep.subr.mxu0 0.0
    %732 = vmatpush1.xpose.msra.mxu0 0.0
    %733 = vmatprep.subr.mxu0 0.0
    %734 = vmatpush1.xpose.msra.mxu0 0.0
    %735 = vmatprep.subr.mxu0 0.0
    %736 = vmatpush1.xpose.msra.mxu0 0.0
    %737 = vmatprep.subr.mxu0 0.0
    %738 = vmatpush1.xpose.msra.mxu0 0.0
    %739 = vmatprep.mubr.f32.mxu0 0.0
    %740 = vmatmul.mubr.f32.gmra.mrb[0].mxu0 %v671
    %v741 = vpop.f32.mrb[0].mxu0
    %v742 = vadd.f32 %v498, %v741
    %v743 = vpop.f32.mrb[0].mxu0
    %744 = vdwg.mxu0
    %v745 = vsel %vm165, %v742, -inf
    %746 = vmax.xlane.f32.xlu0 %v745
    %v747 = vpop.xlane.xlu0 %746
    %v748 = vsub.f32 %v742, %v747
    %v749 = vmul.f32 %v748, 1.442695
    %v750 = vpow.pop %v749
    %v751 = vsel %vm165, %v750, 0.0
    %752 = vadd.xlane.f32.xlu0 %v751
    %v753 = vpop.xlane.xlu0 %752
    %754 = vrot.lane.b32.xlu0 %v158, 56
    %v755 = vpop.permute.xlu0 %754
    %v758 = vsel %vm165, %v750, 0
    %760 = vmatprep.subr.mxu0 0.0
    %761 = vmatpush1.msra.mxu0 %v755
    %762 = vmatprep.subr.mxu0 0.0
    %763 = vmatpush1.msra.mxu0 0.0
    %764 = vmatprep.subr.mxu0 0.0
    %765 = vmatpush1.msra.mxu0 0.0
    %766 = vmatprep.subr.mxu0 0.0
    %767 = vmatpush1.msra.mxu0 0.0
    %768 = vmatprep.subr.mxu0 0.0
    %769 = vmatpush1.msra.mxu0 0.0
    %770 = vmatprep.subr.mxu0 0.0
    %771 = vmatpush1.msra.mxu0 0.0
    %772 = vmatprep.subr.mxu0 0.0
    %773 = vmatpush1.msra.mxu0 0.0
    %774 = vmatprep.subr.mxu0 0.0
    %775 = vmatpush1.msra.mxu0 0.0
    %776 = vmatprep.subr.mxu0 0.0
    %777 = vmatpush1.msra.mxu0 0.0
    %778 = vmatprep.subr.mxu0 0.0
    %779 = vmatpush1.msra.mxu0 0.0
    %780 = vmatprep.subr.mxu0 0.0
    %781 = vmatpush1.msra.mxu0 0.0
    %782 = vmatprep.subr.mxu0 0.0
    %783 = vmatpush1.msra.mxu0 0.0
    %784 = vmatprep.subr.mxu0 0.0
    %785 = vmatpush1.msra.mxu0 0.0
    %786 = vmatprep.subr.mxu0 0.0
    %787 = vmatpush1.msra.mxu0 0.0
    %788 = vmatprep.subr.mxu0 0.0
    %789 = vmatpush1.msra.mxu0 0.0
    %790 = vmatprep.subr.mxu0 0.0
    %791 = vmatpush1.msra.mxu0 0.0
    %792 = vmatprep.subr.mxu0 0.0
    %793 = vmatpush1.msra.mxu0 0.0
    %794 = vmatprep.subr.mxu0 0.0
    %795 = vmatpush1.msra.mxu0 0.0
    %796 = vmatprep.subr.mxu0 0.0
    %797 = vmatpush1.msra.mxu0 0.0
    %798 = vmatprep.subr.mxu0 0.0
    %799 = vmatpush1.msra.mxu0 0.0
    %800 = vmatprep.subr.mxu0 0.0
    %801 = vmatpush1.msra.mxu0 0.0
    %802 = vmatprep.subr.mxu0 0.0
    %803 = vmatpush1.msra.mxu0 0.0
    %804 = vmatprep.subr.mxu0 0.0
    %805 = vmatpush1.msra.mxu0 0.0
    %806 = vmatprep.subr.mxu0 0.0
    %807 = vmatpush1.msra.mxu0 0.0
    %808 = vmatprep.subr.mxu0 0.0
    %809 = vmatpush1.msra.mxu0 0.0
    %810 = vmatprep.subr.mxu0 0.0
    %811 = vmatpush1.msra.mxu0 0.0
    %812 = vmatprep.subr.mxu0 0.0
    %813 = vmatpush1.msra.mxu0 0.0
    %814 = vmatprep.subr.mxu0 0.0
    %815 = vmatpush1.msra.mxu0 0.0
    %816 = vmatprep.subr.mxu0 0.0
    %817 = vmatpush1.msra.mxu0 0.0
    %818 = vmatprep.subr.mxu0 0.0
    %819 = vmatpush1.msra.mxu0 0.0
    %820 = vmatprep.subr.mxu0 0.0
    %821 = vmatpush1.msra.mxu0 0.0
    %822 = vmatprep.subr.mxu0 0.0
    %823 = vmatpush1.msra.mxu0 0.0
    %824 = vmatprep.mubr.f32.mxu0 0.0
    %825 = vmatmul.mubr.f32.gmra.mrb[0].mxu0 %v758
    %v826 = vpop.f32.mrb[0].mxu0
    %v827 = vadd.f32 0.0, %v826
    %v828 = vpop.f32.mrb[0].mxu0
    %829 = vdwg.mxu0
    %v830 = vrcp.pop %v753
    %v831 = vmul.f32 %v753, %v830
    %v832 = vsub.f32 2.0, %v831
    %v833 = vmul.f32 %v830, %v832
    %v834 = vmul.f32 %v827, %v833
    %s835 = scalar_lea.vmem [#allocation7], 16
    %v836 = vld [vmem:[%s835] sm:$0xff]
    %837 = vrot.lane.b32.xlu0 %v153, 112
    %v838 = vpop.permute.xlu0 %837
    %839 = vrot.lane.b32.xlu0 %v153, 80
    %v840 = vpop.permute.xlu0 %839
    %v841 = vsel %vm165, %v838, 0
    %v843 = vsel %vm165, %v840, 0
    %845 = vmatprep.subr.mxu0 0.0
    %846 = vmatpush1.xpose.msra.mxu0 %v843
    %847 = vmatprep.subr.mxu0 0.0
    %848 = vmatpush1.xpose.msra.mxu0 0.0
    %849 = vmatprep.subr.mxu0 0.0
    %850 = vmatpush1.xpose.msra.mxu0 0.0
    %851 = vmatprep.subr.mxu0 0.0
    %852 = vmatpush1.xpose.msra.mxu0 0.0
    %853 = vmatprep.subr.mxu0 0.0
    %854 = vmatpush1.xpose.msra.mxu0 0.0
    %855 = vmatprep.subr.mxu0 0.0
    %856 = vmatpush1.xpose.msra.mxu0 0.0
    %857 = vmatprep.subr.mxu0 0.0
    %858 = vmatpush1.xpose.msra.mxu0 0.0
    %859 = vmatprep.subr.mxu0 0.0
    %860 = vmatpush1.xpose.msra.mxu0 0.0
    %861 = vmatprep.subr.mxu0 0.0
    %862 = vmatpush1.xpose.msra.mxu0 0.0
    %863 = vmatprep.subr.mxu0 0.0
    %864 = vmatpush1.xpose.msra.mxu0 0.0
    %865 = vmatprep.subr.mxu0 0.0
    %866 = vmatpush1.xpose.msra.mxu0 0.0
    %867 = vmatprep.subr.mxu0 0.0
    %868 = vmatpush1.xpose.msra.mxu0 0.0
    %869 = vmatprep.subr.mxu0 0.0
    %870 = vmatpush1.xpose.msra.mxu0 0.0
    %871 = vmatprep.subr.mxu0 0.0
    %872 = vmatpush1.xpose.msra.mxu0 0.0
    %873 = vmatprep.subr.mxu0 0.0
    %874 = vmatpush1.xpose.msra.mxu0 0.0
    %875 = vmatprep.subr.mxu0 0.0
    %876 = vmatpush1.xpose.msra.mxu0 0.0
    %877 = vmatprep.subr.mxu0 0.0
    %878 = vmatpush1.xpose.msra.mxu0 0.0
    %879 = vmatprep.subr.mxu0 0.0
    %880 = vmatpush1.xpose.msra.mxu0 0.0
    %881 = vmatprep.subr.mxu0 0.0
    %882 = vmatpush1.xpose.msra.mxu0 0.0
    %883 = vmatprep.subr.mxu0 0.0
    %884 = vmatpush1.xpose.msra.mxu0 0.0
    %885 = vmatprep.subr.mxu0 0.0
    %886 = vmatpush1.xpose.msra.mxu0 0.0
    %887 = vmatprep.subr.mxu0 0.0
    %888 = vmatpush1.xpose.msra.mxu0 0.0
    %889 = vmatprep.subr.mxu0 0.0
    %890 = vmatpush1.xpose.msra.mxu0 0.0
    %891 = vmatprep.subr.mxu0 0.0
    %892 = vmatpush1.xpose.msra.mxu0 0.0
    %893 = vmatprep.subr.mxu0 0.0
    %894 = vmatpush1.xpose.msra.mxu0 0.0
    %895 = vmatprep.subr.mxu0 0.0
    %896 = vmatpush1.xpose.msra.mxu0 0.0
    %897 = vmatprep.subr.mxu0 0.0
    %898 = vmatpush1.xpose.msra.mxu0 0.0
    %899 = vmatprep.subr.mxu0 0.0
    %900 = vmatpush1.xpose.msra.mxu0 0.0
    %901 = vmatprep.subr.mxu0 0.0
    %902 = vmatpush1.xpose.msra.mxu0 0.0
    %903 = vmatprep.subr.mxu0 0.0
    %904 = vmatpush1.xpose.msra.mxu0 0.0
    %905 = vmatprep.subr.mxu0 0.0
    %906 = vmatpush1.xpose.msra.mxu0 0.0
    %907 = vmatprep.subr.mxu0 0.0
    %908 = vmatpush1.xpose.msra.mxu0 0.0
    %909 = vmatprep.mubr.f32.mxu0 0.0
    %910 = vmatmul.mubr.f32.gmra.mrb[0].mxu0 %v841
    %v911 = vpop.f32.mrb[0].mxu0
    %v912 = vadd.f32 %v836, %v911
    %v913 = vpop.f32.mrb[0].mxu0
    %914 = vdwg.mxu0
    %v915 = vsel %vm165, %v912, -inf
    %916 = vmax.xlane.f32.xlu0 %v915
    %v917 = vpop.xlane.xlu0 %916
    %v918 = vsub.f32 %v912, %v917
    %v919 = vmul.f32 %v918, 1.442695
    %v920 = vpow.pop %v919
    %v921 = vsel %vm165, %v920, 0.0
    %922 = vadd.xlane.f32.xlu0 %v921
    %v923 = vpop.xlane.xlu0 %922
    %924 = vrot.lane.b32.xlu0 %v153, 48
    %v925 = vpop.permute.xlu0 %924
    %v928 = vsel %vm165, %v920, 0
    %930 = vmatprep.subr.mxu0 0.0
    %931 = vmatpush1.msra.mxu0 %v925
    %932 = vmatprep.subr.mxu0 0.0
    %933 = vmatpush1.msra.mxu0 0.0
    %934 = vmatprep.subr.mxu0 0.0
    %935 = vmatpush1.msra.mxu0 0.0
    %936 = vmatprep.subr.mxu0 0.0
    %937 = vmatpush1.msra.mxu0 0.0
    %938 = vmatprep.subr.mxu0 0.0
    %939 = vmatpush1.msra.mxu0 0.0
    %940 = vmatprep.subr.mxu0 0.0
    %941 = vmatpush1.msra.mxu0 0.0
    %942 = vmatprep.subr.mxu0 0.0
    %943 = vmatpush1.msra.mxu0 0.0
    %944 = vmatprep.subr.mxu0 0.0
    %945 = vmatpush1.msra.mxu0 0.0
    %946 = vmatprep.subr.mxu0 0.0
    %947 = vmatpush1.msra.mxu0 0.0
    %948 = vmatprep.subr.mxu0 0.0
    %949 = vmatpush1.msra.mxu0 0.0
    %950 = vmatprep.subr.mxu0 0.0
    %951 = vmatpush1.msra.mxu0 0.0
    %952 = vmatprep.subr.mxu0 0.0
    %953 = vmatpush1.msra.mxu0 0.0
    %954 = vmatprep.subr.mxu0 0.0
    %955 = vmatpush1.msra.mxu0 0.0
    %956 = vmatprep.subr.mxu0 0.0
    %957 = vmatpush1.msra.mxu0 0.0
    %958 = vmatprep.subr.mxu0 0.0
    %959 = vmatpush1.msra.mxu0 0.0
    %960 = vmatprep.subr.mxu0 0.0
    %961 = vmatpush1.msra.mxu0 0.0
    %962 = vmatprep.subr.mxu0 0.0
    %963 = vmatpush1.msra.mxu0 0.0
    %964 = vmatprep.subr.mxu0 0.0
    %965 = vmatpush1.msra.mxu0 0.0
    %966 = vmatprep.subr.mxu0 0.0
    %967 = vmatpush1.msra.mxu0 0.0
    %968 = vmatprep.subr.mxu0 0.0
    %969 = vmatpush1.msra.mxu0 0.0
    %970 = vmatprep.subr.mxu0 0.0
    %971 = vmatpush1.msra.mxu0 0.0
    %972 = vmatprep.subr.mxu0 0.0
    %973 = vmatpush1.msra.mxu0 0.0
    %974 = vmatprep.subr.mxu0 0.0
    %975 = vmatpush1.msra.mxu0 0.0
    %976 = vmatprep.subr.mxu0 0.0
    %977 = vmatpush1.msra.mxu0 0.0
    %978 = vmatprep.subr.mxu0 0.0
    %979 = vmatpush1.msra.mxu0 0.0
    %980 = vmatprep.subr.mxu0 0.0
    %981 = vmatpush1.msra.mxu0 0.0
    %982 = vmatprep.subr.mxu0 0.0
    %983 = vmatpush1.msra.mxu0 0.0
    %984 = vmatprep.subr.mxu0 0.0
    %985 = vmatpush1.msra.mxu0 0.0
    %986 = vmatprep.subr.mxu0 0.0
    %987 = vmatpush1.msra.mxu0 0.0
    %988 = vmatprep.subr.mxu0 0.0
    %989 = vmatpush1.msra.mxu0 0.0
    %990 = vmatprep.subr.mxu0 0.0
    %991 = vmatpush1.msra.mxu0 0.0
    %992 = vmatprep.subr.mxu0 0.0
    %993 = vmatpush1.msra.mxu0 0.0
    %994 = vmatprep.mubr.f32.mxu0 0.0
    %995 = vmatmul.mubr.f32.gmra.mrb[0].mxu0 %v928
    %v996 = vpop.f32.mrb[0].mxu0
    %v997 = vadd.f32 0.0, %v996
    %v998 = vpop.f32.mrb[0].mxu0
    %999 = vdwg.mxu0
    %v1000 = vrcp.pop %v923
    %v1001 = vmul.f32 %v923, %v1000
    %v1002 = vsub.f32 2.0, %v1001
    %v1003 = vmul.f32 %v1000, %v1002
    %v1004 = vmul.f32 %v997, %v1003
    %1005 = vrot.lane.b32.xlu0 %v158, 112
    %v1006 = vpop.permute.xlu0 %1005
    %1007 = vrot.lane.b32.xlu0 %v158, 80
    %v1008 = vpop.permute.xlu0 %1007
    %v1009 = vsel %vm165, %v1006, 0
    %v1011 = vsel %vm165, %v1008, 0
    %1013 = vmatprep.subr.mxu0 0.0
    %1014 = vmatpush1.xpose.msra.mxu0 %v1011
    %1015 = vmatprep.subr.mxu0 0.0
    %1016 = vmatpush1.xpose.msra.mxu0 0.0
    %1017 = vmatprep.subr.mxu0 0.0
    %1018 = vmatpush1.xpose.msra.mxu0 0.0
    %1019 = vmatprep.subr.mxu0 0.0
    %1020 = vmatpush1.xpose.msra.mxu0 0.0
    %1021 = vmatprep.subr.mxu0 0.0
    %1022 = vmatpush1.xpose.msra.mxu0 0.0
    %1023 = vmatprep.subr.mxu0 0.0
    %1024 = vmatpush1.xpose.msra.mxu0 0.0
    %1025 = vmatprep.subr.mxu0 0.0
    %1026 = vmatpush1.xpose.msra.mxu0 0.0
    %1027 = vmatprep.subr.mxu0 0.0
    %1028 = vmatpush1.xpose.msra.mxu0 0.0
    %1029 = vmatprep.subr.mxu0 0.0
    %1030 = vmatpush1.xpose.msra.mxu0 0.0
    %1031 = vmatprep.subr.mxu0 0.0
    %1032 = vmatpush1.xpose.msra.mxu0 0.0
    %1033 = vmatprep.subr.mxu0 0.0
    %1034 = vmatpush1.xpose.msra.mxu0 0.0
    %1035 = vmatprep.subr.mxu0 0.0
    %1036 = vmatpush1.xpose.msra.mxu0 0.0
    %1037 = vmatprep.subr.mxu0 0.0
    %1038 = vmatpush1.xpose.msra.mxu0 0.0
    %1039 = vmatprep.subr.mxu0 0.0
    %1040 = vmatpush1.xpose.msra.mxu0 0.0
    %1041 = vmatprep.subr.mxu0 0.0
    %1042 = vmatpush1.xpose.msra.mxu0 0.0
    %1043 = vmatprep.subr.mxu0 0.0
    %1044 = vmatpush1.xpose.msra.mxu0 0.0
    %1045 = vmatprep.subr.mxu0 0.0
    %1046 = vmatpush1.xpose.msra.mxu0 0.0
    %1047 = vmatprep.subr.mxu0 0.0
    %1048 = vmatpush1.xpose.msra.mxu0 0.0
    %1049 = vmatprep.subr.mxu0 0.0
    %1050 = vmatpush1.xpose.msra.mxu0 0.0
    %1051 = vmatprep.subr.mxu0 0.0
    %1052 = vmatpush1.xpose.msra.mxu0 0.0
    %1053 = vmatprep.subr.mxu0 0.0
    %1054 = vmatpush1.xpose.msra.mxu0 0.0
    %1055 = vmatprep.subr.mxu0 0.0
    %1056 = vmatpush1.xpose.msra.mxu0 0.0
    %1057 = vmatprep.subr.mxu0 0.0
    %1058 = vmatpush1.xpose.msra.mxu0 0.0
    %1059 = vmatprep.subr.mxu0 0.0
    %1060 = vmatpush1.xpose.msra.mxu0 0.0
    %1061 = vmatprep.subr.mxu0 0.0
    %1062 = vmatpush1.xpose.msra.mxu0 0.0
    %1063 = vmatprep.subr.mxu0 0.0
    %1064 = vmatpush1.xpose.msra.mxu0 0.0
    %1065 = vmatprep.subr.mxu0 0.0
    %1066 = vmatpush1.xpose.msra.mxu0 0.0
    %1067 = vmatprep.subr.mxu0 0.0
    %1068 = vmatpush1.xpose.msra.mxu0 0.0
    %1069 = vmatprep.subr.mxu0 0.0
    %1070 = vmatpush1.xpose.msra.mxu0 0.0
    %1071 = vmatprep.subr.mxu0 0.0
    %1072 = vmatpush1.xpose.msra.mxu0 0.0
    %1073 = vmatprep.subr.mxu0 0.0
    %1074 = vmatpush1.xpose.msra.mxu0 0.0
    %1075 = vmatprep.subr.mxu0 0.0
    %1076 = vmatpush1.xpose.msra.mxu0 0.0
    %1077 = vmatprep.mubr.f32.mxu0 0.0
    %1078 = vmatmul.mubr.f32.gmra.mrb[0].mxu0 %v1009
    %v1079 = vpop.f32.mrb[0].mxu0
    %v1080 = vadd.f32 %v836, %v1079
    %v1081 = vpop.f32.mrb[0].mxu0
    %1082 = vdwg.mxu0
    %v1083 = vsel %vm165, %v1080, -inf
    %1084 = vmax.xlane.f32.xlu0 %v1083
    %v1085 = vpop.xlane.xlu0 %1084
    %v1086 = vsub.f32 %v1080, %v1085
    %v1087 = vmul.f32 %v1086, 1.442695
    %v1088 = vpow.pop %v1087
    %v1089 = vsel %vm165, %v1088, 0.0
    %1090 = vadd.xlane.f32.xlu0 %v1089
    %v1091 = vpop.xlane.xlu0 %1090
    %1092 = vrot.lane.b32.xlu0 %v158, 48
    %v1093 = vpop.permute.xlu0 %1092
    %v1096 = vsel %vm165, %v1088, 0
    %1098 = vmatprep.subr.mxu0 0.0
    %1099 = vmatpush1.msra.mxu0 %v1093
    %1100 = vmatprep.subr.mxu0 0.0
    %1101 = vmatpush1.msra.mxu0 0.0
    %1102 = vmatprep.subr.mxu0 0.0
    %1103 = vmatpush1.msra.mxu0 0.0
    %1104 = vmatprep.subr.mxu0 0.0
    %1105 = vmatpush1.msra.mxu0 0.0
    %1106 = vmatprep.subr.mxu0 0.0
    %1107 = vmatpush1.msra.mxu0 0.0
    %1108 = vmatprep.subr.mxu0 0.0
    %1109 = vmatpush1.msra.mxu0 0.0
    %1110 = vmatprep.subr.mxu0 0.0
    %1111 = vmatpush1.msra.mxu0 0.0
    %1112 = vmatprep.subr.mxu0 0.0
    %1113 = vmatpush1.msra.mxu0 0.0
    %1114 = vmatprep.subr.mxu0 0.0
    %1115 = vmatpush1.msra.mxu0 0.0
    %1116 = vmatprep.subr.mxu0 0.0
    %1117 = vmatpush1.msra.mxu0 0.0
    %1118 = vmatprep.subr.mxu0 0.0
    %1119 = vmatpush1.msra.mxu0 0.0
    %1120 = vmatprep.subr.mxu0 0.0
    %1121 = vmatpush1.msra.mxu0 0.0
    %1122 = vmatprep.subr.mxu0 0.0
    %1123 = vmatpush1.msra.mxu0 0.0
    %1124 = vmatprep.subr.mxu0 0.0
    %1125 = vmatpush1.msra.mxu0 0.0
    %1126 = vmatprep.subr.mxu0 0.0
    %1127 = vmatpush1.msra.mxu0 0.0
    %1128 = vmatprep.subr.mxu0 0.0
    %1129 = vmatpush1.msra.mxu0 0.0
    %1130 = vmatprep.subr.mxu0 0.0
    %1131 = vmatpush1.msra.mxu0 0.0
    %1132 = vmatprep.subr.mxu0 0.0
    %1133 = vmatpush1.msra.mxu0 0.0
    %1134 = vmatprep.subr.mxu0 0.0
    %1135 = vmatpush1.msra.mxu0 0.0
    %1136 = vmatprep.subr.mxu0 0.0
    %1137 = vmatpush1.msra.mxu0 0.0
    %1138 = vmatprep.subr.mxu0 0.0
    %1139 = vmatpush1.msra.mxu0 0.0
    %1140 = vmatprep.subr.mxu0 0.0
    %1141 = vmatpush1.msra.mxu0 0.0
    %1142 = vmatprep.subr.mxu0 0.0
    %1143 = vmatpush1.msra.mxu0 0.0
    %1144 = vmatprep.subr.mxu0 0.0
    %1145 = vmatpush1.msra.mxu0 0.0
    %1146 = vmatprep.subr.mxu0 0.0
    %1147 = vmatpush1.msra.mxu0 0.0
    %1148 = vmatprep.subr.mxu0 0.0
    %1149 = vmatpush1.msra.mxu0 0.0
    %1150 = vmatprep.subr.mxu0 0.0
    %1151 = vmatpush1.msra.mxu0 0.0
    %1152 = vmatprep.subr.mxu0 0.0
    %1153 = vmatpush1.msra.mxu0 0.0
    %1154 = vmatprep.subr.mxu0 0.0
    %1155 = vmatpush1.msra.mxu0 0.0
    %1156 = vmatprep.subr.mxu0 0.0
    %1157 = vmatpush1.msra.mxu0 0.0
    %1158 = vmatprep.subr.mxu0 0.0
    %1159 = vmatpush1.msra.mxu0 0.0
    %1160 = vmatprep.subr.mxu0 0.0
    %1161 = vmatpush1.msra.mxu0 0.0
    %1162 = vmatprep.mubr.f32.mxu0 0.0
    %1163 = vmatmul.mubr.f32.gmra.mrb[0].mxu0 %v1096
    %v1164 = vpop.f32.mrb[0].mxu0
    %v1165 = vadd.f32 0.0, %v1164
    %v1166 = vpop.f32.mrb[0].mxu0
    %1167 = vdwg.mxu0
    %v1168 = vrcp.pop %v1091
    %v1169 = vmul.f32 %v1091, %v1168
    %v1170 = vsub.f32 2.0, %v1169
    %v1171 = vmul.f32 %v1168, %v1170
    %v1172 = vmul.f32 %v1165, %v1171
    %s1173 = scalar_lea.vmem [#allocation7], 24
    %v1174 = vld [vmem:[%s1173] sm:$0xff]
    %1175 = vrot.lane.b32.xlu0 %v153, 104
    %v1176 = vpop.permute.xlu0 %1175
    %1177 = vrot.lane.b32.xlu0 %v153, 72
    %v1178 = vpop.permute.xlu0 %1177
    %v1179 = vsel %vm165, %v1176, 0
    %v1181 = vsel %vm165, %v1178, 0
    %1183 = vmatprep.subr.mxu0 0.0
    %1184 = vmatpush1.xpose.msra.mxu0 %v1181
    %1185 = vmatprep.subr.mxu0 0.0
    %1186 = vmatpush1.xpose.msra.mxu0 0.0
    %1187 = vmatprep.subr.mxu0 0.0
    %1188 = vmatpush1.xpose.msra.mxu0 0.0
    %1189 = vmatprep.subr.mxu0 0.0
    %1190 = vmatpush1.xpose.msra.mxu0 0.0
    %1191 = vmatprep.subr.mxu0 0.0
    %1192 = vmatpush1.xpose.msra.mxu0 0.0
    %1193 = vmatprep.subr.mxu0 0.0
    %1194 = vmatpush1.xpose.msra.mxu0 0.0
    %1195 = vmatprep.subr.mxu0 0.0
    %1196 = vmatpush1.xpose.msra.mxu0 0.0
    %1197 = vmatprep.subr.mxu0 0.0
    %1198 = vmatpush1.xpose.msra.mxu0 0.0
    %1199 = vmatprep.subr.mxu0 0.0
    %1200 = vmatpush1.xpose.msra.mxu0 0.0
    %1201 = vmatprep.subr.mxu0 0.0
    %1202 = vmatpush1.xpose.msra.mxu0 0.0
    %1203 = vmatprep.subr.mxu0 0.0
    %1204 = vmatpush1.xpose.msra.mxu0 0.0
    %1205 = vmatprep.subr.mxu0 0.0
    %1206 = vmatpush1.xpose.msra.mxu0 0.0
    %1207 = vmatprep.subr.mxu0 0.0
    %1208 = vmatpush1.xpose.msra.mxu0 0.0
    %1209 = vmatprep.subr.mxu0 0.0
    %1210 = vmatpush1.xpose.msra.mxu0 0.0
    %1211 = vmatprep.subr.mxu0 0.0
    %1212 = vmatpush1.xpose.msra.mxu0 0.0
    %1213 = vmatprep.subr.mxu0 0.0
    %1214 = vmatpush1.xpose.msra.mxu0 0.0
    %1215 = vmatprep.subr.mxu0 0.0
    %1216 = vmatpush1.xpose.msra.mxu0 0.0
    %1217 = vmatprep.subr.mxu0 0.0
    %1218 = vmatpush1.xpose.msra.mxu0 0.0
    %1219 = vmatprep.subr.mxu0 0.0
    %1220 = vmatpush1.xpose.msra.mxu0 0.0
    %1221 = vmatprep.subr.mxu0 0.0
    %1222 = vmatpush1.xpose.msra.mxu0 0.0
    %1223 = vmatprep.subr.mxu0 0.0
    %1224 = vmatpush1.xpose.msra.mxu0 0.0
    %1225 = vmatprep.subr.mxu0 0.0
    %1226 = vmatpush1.xpose.msra.mxu0 0.0
    %1227 = vmatprep.subr.mxu0 0.0
    %1228 = vmatpush1.xpose.msra.mxu0 0.0
    %1229 = vmatprep.subr.mxu0 0.0
    %1230 = vmatpush1.xpose.msra.mxu0 0.0
    %1231 = vmatprep.subr.mxu0 0.0
    %1232 = vmatpush1.xpose.msra.mxu0 0.0
    %1233 = vmatprep.subr.mxu0 0.0
    %1234 = vmatpush1.xpose.msra.mxu0 0.0
    %1235 = vmatprep.subr.mxu0 0.0
    %1236 = vmatpush1.xpose.msra.mxu0 0.0
    %1237 = vmatprep.subr.mxu0 0.0
    %1238 = vmatpush1.xpose.msra.mxu0 0.0
    %1239 = vmatprep.subr.mxu0 0.0
    %1240 = vmatpush1.xpose.msra.mxu0 0.0
    %1241 = vmatprep.subr.mxu0 0.0
    %1242 = vmatpush1.xpose.msra.mxu0 0.0
    %1243 = vmatprep.subr.mxu0 0.0
    %1244 = vmatpush1.xpose.msra.mxu0 0.0
    %1245 = vmatprep.subr.mxu0 0.0
    %1246 = vmatpush1.xpose.msra.mxu0 0.0
    %1247 = vmatprep.mubr.f32.mxu0 0.0
    %1248 = vmatmul.mubr.f32.gmra.mrb[0].mxu0 %v1179
    %v1249 = vpop.f32.mrb[0].mxu0
    %v1250 = vadd.f32 %v1174, %v1249
    %v1251 = vpop.f32.mrb[0].mxu0
    %1252 = vdwg.mxu0
    %v1253 = vsel %vm165, %v1250, -inf
    %1254 = vmax.xlane.f32.xlu0 %v1253
    %v1255 = vpop.xlane.xlu0 %1254
    %v1256 = vsub.f32 %v1250, %v1255
    %v1257 = vmul.f32 %v1256, 1.442695
    %v1258 = vpow.pop %v1257
    %v1259 = vsel %vm165, %v1258, 0.0
    %1260 = vadd.xlane.f32.xlu0 %v1259
    %v1261 = vpop.xlane.xlu0 %1260
    %1262 = vrot.lane.b32.xlu0 %v153, 40
    %v1263 = vpop.permute.xlu0 %1262
    %v1266 = vsel %vm165, %v1258, 0
    %1268 = vmatprep.subr.mxu0 0.0
    %1269 = vmatpush1.msra.mxu0 %v1263
    %1270 = vmatprep.subr.mxu0 0.0
    %1271 = vmatpush1.msra.mxu0 0.0
    %1272 = vmatprep.subr.mxu0 0.0
    %1273 = vmatpush1.msra.mxu0 0.0
    %1274 = vmatprep.subr.mxu0 0.0
    %1275 = vmatpush1.msra.mxu0 0.0
    %1276 = vmatprep.subr.mxu0 0.0
    %1277 = vmatpush1.msra.mxu0 0.0
    %1278 = vmatprep.subr.mxu0 0.0
    %1279 = vmatpush1.msra.mxu0 0.0
    %1280 = vmatprep.subr.mxu0 0.0
    %1281 = vmatpush1.msra.mxu0 0.0
    %1282 = vmatprep.subr.mxu0 0.0
    %1283 = vmatpush1.msra.mxu0 0.0
    %1284 = vmatprep.subr.mxu0 0.0
    %1285 = vmatpush1.msra.mxu0 0.0
    %1286 = vmatprep.subr.mxu0 0.0
    %1287 = vmatpush1.msra.mxu0 0.0
    %1288 = vmatprep.subr.mxu0 0.0
    %1289 = vmatpush1.msra.mxu0 0.0
    %1290 = vmatprep.subr.mxu0 0.0
    %1291 = vmatpush1.msra.mxu0 0.0
    %1292 = vmatprep.subr.mxu0 0.0
    %1293 = vmatpush1.msra.mxu0 0.0
    %1294 = vmatprep.subr.mxu0 0.0
    %1295 = vmatpush1.msra.mxu0 0.0
    %1296 = vmatprep.subr.mxu0 0.0
    %1297 = vmatpush1.msra.mxu0 0.0
    %1298 = vmatprep.subr.mxu0 0.0
    %1299 = vmatpush1.msra.mxu0 0.0
    %1300 = vmatprep.subr.mxu0 0.0
    %1301 = vmatpush1.msra.mxu0 0.0
    %1302 = vmatprep.subr.mxu0 0.0
    %1303 = vmatpush1.msra.mxu0 0.0
    %1304 = vmatprep.subr.mxu0 0.0
    %1305 = vmatpush1.msra.mxu0 0.0
    %1306 = vmatprep.subr.mxu0 0.0
    %1307 = vmatpush1.msra.mxu0 0.0
    %1308 = vmatprep.subr.mxu0 0.0
    %1309 = vmatpush1.msra.mxu0 0.0
    %1310 = vmatprep.subr.mxu0 0.0
    %1311 = vmatpush1.msra.mxu0 0.0
    %1312 = vmatprep.subr.mxu0 0.0
    %1313 = vmatpush1.msra.mxu0 0.0
    %1314 = vmatprep.subr.mxu0 0.0
    %1315 = vmatpush1.msra.mxu0 0.0
    %1316 = vmatprep.subr.mxu0 0.0
    %1317 = vmatpush1.msra.mxu0 0.0
    %1318 = vmatprep.subr.mxu0 0.0
    %1319 = vmatpush1.msra.mxu0 0.0
    %1320 = vmatprep.subr.mxu0 0.0
    %1321 = vmatpush1.msra.mxu0 0.0
    %1322 = vmatprep.subr.mxu0 0.0
    %1323 = vmatpush1.msra.mxu0 0.0
    %1324 = vmatprep.subr.mxu0 0.0
    %1325 = vmatpush1.msra.mxu0 0.0
    %1326 = vmatprep.subr.mxu0 0.0
    %1327 = vmatpush1.msra.mxu0 0.0
    %1328 = vmatprep.subr.mxu0 0.0
    %1329 = vmatpush1.msra.mxu0 0.0
    %1330 = vmatprep.subr.mxu0 0.0
    %1331 = vmatpush1.msra.mxu0 0.0
    %1332 = vmatprep.mubr.f32.mxu0 0.0
    %1333 = vmatmul.mubr.f32.gmra.mrb[0].mxu0 %v1266
    %v1334 = vpop.f32.mrb[0].mxu0
    %v1335 = vadd.f32 0.0, %v1334
    %v1336 = vpop.f32.mrb[0].mxu0
    %1337 = vdwg.mxu0
    %v1338 = vrcp.pop %v1261
    %v1339 = vmul.f32 %v1261, %v1338
    %v1340 = vsub.f32 2.0, %v1339
    %v1341 = vmul.f32 %v1338, %v1340
    %v1342 = vmul.f32 %v1335, %v1341
    %1343 = vrot.lane.b32.xlu0 %v158, 104
    %v1344 = vpop.permute.xlu0 %1343
    %1345 = vrot.lane.b32.xlu0 %v158, 72
    %v1346 = vpop.permute.xlu0 %1345
    %v1347 = vsel %vm165, %v1344, 0
    %v1349 = vsel %vm165, %v1346, 0
    %1351 = vmatprep.subr.mxu0 0.0
    %1352 = vmatpush1.xpose.msra.mxu0 %v1349
    %1353 = vmatprep.subr.mxu0 0.0
    %1354 = vmatpush1.xpose.msra.mxu0 0.0
    %1355 = vmatprep.subr.mxu0 0.0
    %1356 = vmatpush1.xpose.msra.mxu0 0.0
    %1357 = vmatprep.subr.mxu0 0.0
    %1358 = vmatpush1.xpose.msra.mxu0 0.0
    %1359 = vmatprep.subr.mxu0 0.0
    %1360 = vmatpush1.xpose.msra.mxu0 0.0
    %1361 = vmatprep.subr.mxu0 0.0
    %1362 = vmatpush1.xpose.msra.mxu0 0.0
    %1363 = vmatprep.subr.mxu0 0.0
    %1364 = vmatpush1.xpose.msra.mxu0 0.0
    %1365 = vmatprep.subr.mxu0 0.0
    %1366 = vmatpush1.xpose.msra.mxu0 0.0
    %1367 = vmatprep.subr.mxu0 0.0
    %1368 = vmatpush1.xpose.msra.mxu0 0.0
    %1369 = vmatprep.subr.mxu0 0.0
    %1370 = vmatpush1.xpose.msra.mxu0 0.0
    %1371 = vmatprep.subr.mxu0 0.0
    %1372 = vmatpush1.xpose.msra.mxu0 0.0
    %1373 = vmatprep.subr.mxu0 0.0
    %1374 = vmatpush1.xpose.msra.mxu0 0.0
    %1375 = vmatprep.subr.mxu0 0.0
    %1376 = vmatpush1.xpose.msra.mxu0 0.0
    %1377 = vmatprep.subr.mxu0 0.0
    %1378 = vmatpush1.xpose.msra.mxu0 0.0
    %1379 = vmatprep.subr.mxu0 0.0
    %1380 = vmatpush1.xpose.msra.mxu0 0.0
    %1381 = vmatprep.subr.mxu0 0.0
    %1382 = vmatpush1.xpose.msra.mxu0 0.0
    %1383 = vmatprep.subr.mxu0 0.0
    %1384 = vmatpush1.xpose.msra.mxu0 0.0
    %1385 = vmatprep.subr.mxu0 0.0
    %1386 = vmatpush1.xpose.msra.mxu0 0.0
    %1387 = vmatprep.subr.mxu0 0.0
    %1388 = vmatpush1.xpose.msra.mxu0 0.0
    %1389 = vmatprep.subr.mxu0 0.0
    %1390 = vmatpush1.xpose.msra.mxu0 0.0
    %1391 = vmatprep.subr.mxu0 0.0
    %1392 = vmatpush1.xpose.msra.mxu0 0.0
    %1393 = vmatprep.subr.mxu0 0.0
    %1394 = vmatpush1.xpose.msra.mxu0 0.0
    %1395 = vmatprep.subr.mxu0 0.0
    %1396 = vmatpush1.xpose.msra.mxu0 0.0
    %1397 = vmatprep.subr.mxu0 0.0
    %1398 = vmatpush1.xpose.msra.mxu0 0.0
    %1399 = vmatprep.subr.mxu0 0.0
    %1400 = vmatpush1.xpose.msra.mxu0 0.0
    %1401 = vmatprep.subr.mxu0 0.0
    %1402 = vmatpush1.xpose.msra.mxu0 0.0
    %1403 = vmatprep.subr.mxu0 0.0
    %1404 = vmatpush1.xpose.msra.mxu0 0.0
    %1405 = vmatprep.subr.mxu0 0.0
    %1406 = vmatpush1.xpose.msra.mxu0 0.0
    %1407 = vmatprep.subr.mxu0 0.0
    %1408 = vmatpush1.xpose.msra.mxu0 0.0
    %1409 = vmatprep.subr.mxu0 0.0
    %1410 = vmatpush1.xpose.msra.mxu0 0.0
    %1411 = vmatprep.subr.mxu0 0.0
    %1412 = vmatpush1.xpose.msra.mxu0 0.0
    %1413 = vmatprep.subr.mxu0 0.0
    %1414 = vmatpush1.xpose.msra.mxu0 0.0
    %1415 = vmatprep.mubr.f32.mxu0 0.0
    %1416 = vmatmul.mubr.f32.gmra.mrb[0].mxu0 %v1347
    %v1417 = vpop.f32.mrb[0].mxu0
    %v1418 = vadd.f32 %v1174, %v1417
    %v1419 = vpop.f32.mrb[0].mxu0
    %1420 = vdwg.mxu0
    %v1421 = vsel %vm165, %v1418, -inf
    %1422 = vmax.xlane.f32.xlu0 %v1421
    %v1423 = vpop.xlane.xlu0 %1422
    %v1424 = vsub.f32 %v1418, %v1423
    %v1425 = vmul.f32 %v1424, 1.442695
    %v1426 = vpow.pop %v1425
    %v1427 = vsel %vm165, %v1426, 0.0
    %1428 = vadd.xlane.f32.xlu0 %v1427
    %v1429 = vpop.xlane.xlu0 %1428
    %1430 = vrot.lane.b32.xlu0 %v158, 40
    %v1431 = vpop.permute.xlu0 %1430
    %v1434 = vsel %vm165, %v1426, 0
    %1436 = vmatprep.subr.mxu0 0.0
    %1437 = vmatpush1.msra.mxu0 %v1431
    %1438 = vmatprep.subr.mxu0 0.0
    %1439 = vmatpush1.msra.mxu0 0.0
    %1440 = vmatprep.subr.mxu0 0.0
    %1441 = vmatpush1.msra.mxu0 0.0
    %1442 = vmatprep.subr.mxu0 0.0
    %1443 = vmatpush1.msra.mxu0 0.0
    %1444 = vmatprep.subr.mxu0 0.0
    %1445 = vmatpush1.msra.mxu0 0.0
    %1446 = vmatprep.subr.mxu0 0.0
    %1447 = vmatpush1.msra.mxu0 0.0
    %1448 = vmatprep.subr.mxu0 0.0
    %1449 = vmatpush1.msra.mxu0 0.0
    %1450 = vmatprep.subr.mxu0 0.0
    %1451 = vmatpush1.msra.mxu0 0.0
    %1452 = vmatprep.subr.mxu0 0.0
    %1453 = vmatpush1.msra.mxu0 0.0
    %1454 = vmatprep.subr.mxu0 0.0
    %1455 = vmatpush1.msra.mxu0 0.0
    %1456 = vmatprep.subr.mxu0 0.0
    %1457 = vmatpush1.msra.mxu0 0.0
    %1458 = vmatprep.subr.mxu0 0.0
    %1459 = vmatpush1.msra.mxu0 0.0
    %1460 = vmatprep.subr.mxu0 0.0
    %1461 = vmatpush1.msra.mxu0 0.0
    %1462 = vmatprep.subr.mxu0 0.0
    %1463 = vmatpush1.msra.mxu0 0.0
    %1464 = vmatprep.subr.mxu0 0.0
    %1465 = vmatpush1.msra.mxu0 0.0
    %1466 = vmatprep.subr.mxu0 0.0
    %1467 = vmatpush1.msra.mxu0 0.0
    %1468 = vmatprep.subr.mxu0 0.0
    %1469 = vmatpush1.msra.mxu0 0.0
    %1470 = vmatprep.subr.mxu0 0.0
    %1471 = vmatpush1.msra.mxu0 0.0
    %1472 = vmatprep.subr.mxu0 0.0
    %1473 = vmatpush1.msra.mxu0 0.0
    %1474 = vmatprep.subr.mxu0 0.0
    %1475 = vmatpush1.msra.mxu0 0.0
    %1476 = vmatprep.subr.mxu0 0.0
    %1477 = vmatpush1.msra.mxu0 0.0
    %1478 = vmatprep.subr.mxu0 0.0
    %1479 = vmatpush1.msra.mxu0 0.0
    %1480 = vmatprep.subr.mxu0 0.0
    %1481 = vmatpush1.msra.mxu0 0.0
    %1482 = vmatprep.subr.mxu0 0.0
    %1483 = vmatpush1.msra.mxu0 0.0
    %1484 = vmatprep.subr.mxu0 0.0
    %1485 = vmatpush1.msra.mxu0 0.0
    %1486 = vmatprep.subr.mxu0 0.0
    %1487 = vmatpush1.msra.mxu0 0.0
    %1488 = vmatprep.subr.mxu0 0.0
    %1489 = vmatpush1.msra.mxu0 0.0
    %1490 = vmatprep.subr.mxu0 0.0
    %1491 = vmatpush1.msra.mxu0 0.0
    %1492 = vmatprep.subr.mxu0 0.0
    %1493 = vmatpush1.msra.mxu0 0.0
    %1494 = vmatprep.subr.mxu0 0.0
    %1495 = vmatpush1.msra.mxu0 0.0
    %1496 = vmatprep.subr.mxu0 0.0
    %1497 = vmatpush1.msra.mxu0 0.0
    %1498 = vmatprep.subr.mxu0 0.0
    %1499 = vmatpush1.msra.mxu0 0.0
    %1500 = vmatprep.mubr.f32.mxu0 0.0
    %1501 = vmatmul.mubr.f32.gmra.mrb[0].mxu0 %v1434
    %v1502 = vpop.f32.mrb[0].mxu0
    %v1503 = vadd.f32 0.0, %v1502
    %v1504 = vpop.f32.mrb[0].mxu0
    %1505 = vdwg.mxu0
    %v1506 = vrcp.pop %v1429
    %v1507 = vmul.f32 %v1429, %v1506
    %v1508 = vsub.f32 2.0, %v1507
    %v1509 = vmul.f32 %v1506, %v1508
    %v1510 = vmul.f32 %v1503, %v1509
    %1513 = vrot.lane.b32.xlu0 %v666, 8
    %v1514 = vpop.permute.xlu0 %1513
    %1515 = vrot.lane.b32.xlu0 %v834, 8
    %v1516 = vpop.permute.xlu0 %1515
    %1521 = vrot.lane.b32.xlu0 %v1004, 16
    %v1522 = vpop.permute.xlu0 %1521
    %1523 = vrot.lane.b32.xlu0 %v1172, 16
    %v1524 = vpop.permute.xlu0 %1523
    %1529 = vrot.lane.b32.xlu0 %v1342, 24
    %v1530 = vpop.permute.xlu0 %1529
    %1531 = vrot.lane.b32.xlu0 %v1510, 24
    %v1532 = vpop.permute.xlu0 %1531
    %v1535 = vsel %vm165, %v329, %v1514
    %v1536 = vsel %vm165, %v496, %v1516
    %vm1537 = vcmask 130048
    %v1538 = vsel %vm1537, %v1535, %v1522
    %v1539 = vsel %vm1537, %v1536, %v1524
    %vm1540 = vcmask 195584
    %v1541 = vsel %vm1540, %v1538, %v1530
    %v1542 = vsel %vm1540, %v1539, %v1532
    %1547 = vrot.lane.b32.xlu0 %v76, 32
    %v1548 = vpop.permute.xlu0 %1547
    %1549 = vrot.lane.b32.xlu0 %v77, 32
    %v1550 = vpop.permute.xlu0 %1549
    %1551 = vrot.lane.b32.xlu0 %v78, 32
    %v1552 = vpop.permute.xlu0 %1551
    %1553 = vrot.lane.b32.xlu0 %v79, 32
    %v1554 = vpop.permute.xlu0 %1553
    %v1560 = vsel %vm60, %v1541, 0
    %v1563 = vsel %vm60, %v1542, 0
    %1565 = vmatprep.subr.mxu0 0.0
    %1566 = vmatpush1.msra.mxu0 %v1548
    %1567 = vmatprep.subr.mxu0 0.0
    %1568 = vmatpush1.msra.mxu0 %v1550
    %1569 = vmatprep.subr.mxu0 0.0
    %1570 = vmatpush1.msra.mxu0 %v1552
    %1571 = vmatprep.subr.mxu0 0.0
    %1572 = vmatpush1.msra.mxu0 %v1554
    %1573 = vmatprep.subr.mxu0 0.0
    %1574 = vmatpush1.msra.mxu0 0.0
    %1575 = vmatprep.subr.mxu0 0.0
    %1576 = vmatpush1.msra.mxu0 0.0
    %1577 = vmatprep.subr.mxu0 0.0
    %1578 = vmatpush1.msra.mxu0 0.0
    %1579 = vmatprep.subr.mxu0 0.0
    %1580 = vmatpush1.msra.mxu0 0.0
    %1581 = vmatprep.subr.mxu0 0.0
    %1582 = vmatpush1.msra.mxu0 0.0
    %1583 = vmatprep.subr.mxu0 0.0
    %1584 = vmatpush1.msra.mxu0 0.0
    %1585 = vmatprep.subr.mxu0 0.0
    %1586 = vmatpush1.msra.mxu0 0.0
    %1587 = vmatprep.subr.mxu0 0.0
    %1588 = vmatpush1.msra.mxu0 0.0
    %1589 = vmatprep.subr.mxu0 0.0
    %1590 = vmatpush1.msra.mxu0 0.0
    %1591 = vmatprep.subr.mxu0 0.0
    %1592 = vmatpush1.msra.mxu0 0.0
    %1593 = vmatprep.subr.mxu0 0.0
    %1594 = vmatpush1.msra.mxu0 0.0
    %1595 = vmatprep.subr.mxu0 0.0
    %1596 = vmatpush1.msra.mxu0 0.0
    %1597 = vmatprep.subr.mxu0 0.0
    %1598 = vmatpush1.msra.mxu0 0.0
    %1599 = vmatprep.subr.mxu0 0.0
    %1600 = vmatpush1.msra.mxu0 0.0
    %1601 = vmatprep.subr.mxu0 0.0
    %1602 = vmatpush1.msra.mxu0 0.0
    %1603 = vmatprep.subr.mxu0 0.0
    %1604 = vmatpush1.msra.mxu0 0.0
    %1605 = vmatprep.subr.mxu0 0.0
    %1606 = vmatpush1.msra.mxu0 0.0
    %1607 = vmatprep.subr.mxu0 0.0
    %1608 = vmatpush1.msra.mxu0 0.0
    %1609 = vmatprep.subr.mxu0 0.0
    %1610 = vmatpush1.msra.mxu0 0.0
    %1611 = vmatprep.subr.mxu0 0.0
    %1612 = vmatpush1.msra.mxu0 0.0
    %1613 = vmatprep.subr.mxu0 0.0
    %1614 = vmatpush1.msra.mxu0 0.0
    %1615 = vmatprep.subr.mxu0 0.0
    %1616 = vmatpush1.msra.mxu0 0.0
    %1617 = vmatprep.subr.mxu0 0.0
    %1618 = vmatpush1.msra.mxu0 0.0
    %1619 = vmatprep.subr.mxu0 0.0
    %1620 = vmatpush1.msra.mxu0 0.0
    %1621 = vmatprep.subr.mxu0 0.0
    %1622 = vmatpush1.msra.mxu0 0.0
    %1623 = vmatprep.subr.mxu0 0.0
    %1624 = vmatpush1.msra.mxu0 0.0
    %1625 = vmatprep.subr.mxu0 0.0
    %1626 = vmatpush1.msra.mxu0 0.0
    %1627 = vmatprep.subr.mxu0 0.0
    %1628 = vmatpush1.msra.mxu0 0.0
    %1629 = vmatprep.mubr.f32.mxu0 0.0
    %1630 = vmatmul.mubr.f32.gmra.mrb[0].mxu0 %v1560
    %v1631 = vpop.f32.mrb[0].mxu0
    %v1632 = vadd.f32 0.0, %v1631
    %v1633 = vpop.f32.mrb[0].mxu0
    %1634 = vmatprep.mubr.f32.mxu0 0.0
    %1635 = vmatmul.mubr.f32.gmra.mrb[0].mxu0 %v1563
    %v1636 = vpop.f32.mrb[0].mxu0
    %v1637 = vadd.f32 0.0, %v1636
    %v1638 = vpop.f32.mrb[0].mxu0
    %1639 = vdwg.mxu0
    %v1640 = vadd.f32 %v56, %v1632
    %v1641 = vadd.f32 %v57, %v1637
    %1642 = vst.msk [vmem:[#allocation8] sm:$0xff] %vm60, %v1640
    %1643 = vst.msk [vmem:[#allocation8 + $0x8] sm:$0xff] %vm60, %v1641
    // Predicated region
    $region26: #{tpu_custom_call.1} parent=1 // pred_check
      _
    $region27: #{tpu_custom_call.1} parent=1 // pred_check_branch
      %1645 = sbr.rel (0) target = $region29
    $region28: #{tpu_custom_call.1} parent=1 // pred_region
      %s1647 = ssub.s32 256, 256
      %1648 = vsyncadd [#allocation4], %s1647
      %s1649 = sshll.u32 [#allocation8], 4
      %s1650 = int_to_ptr.vmem [resolvable:$true] %s1649
      %1655 = dma.vmem_to_hbm [thread:$0]  %s1650, 256, %s3, [#allocation4], 128, 128, 8
    $region29: #{tpu_custom_call.1} parent=1 // pred_fallthru
      _
    // Predicated region
    $region30: #{tpu_custom_call.1} parent=1 // pred_check
      _
    $region31: #{tpu_custom_call.1} parent=1 // pred_check_branch
      %1657 = sbr.rel (0) target = $region33
    $region32: #{tpu_custom_call.1} parent=1 // pred_region
      %1658 = dma.done [#allocation4], 256
    $region33: #{tpu_custom_call.1} parent=1 // pred_fallthru
      _
    %1659 = vsyncpa [#allocation3], 1
    %1660 = vsyncpa [#allocation6], 1
    %1661 = vsyncpa [#allocation4], 1

</llo_original>
